<compile_context>
chip_gen: v6e
topology: v6e:2x2x1
jax: 0.10.0
libtpu: 0.0.40
codegen_flags: <defaults>
</compile_context>

<pallas_src>
import jax
import jax.numpy as jnp
from jax.experimental import pallas as pl
from jax.experimental.pallas import tpu as pltpu

IN_FEATURES = 1536
OUT_FEATURES = 384
BLOCK_M = 112  # multiple of 8 sublanes; cdiv(196, 112) = 2 row blocks


def _linear_kernel(x_ref, w_ref, b_ref, o_ref):
    """One row-tile of y = x @ W + b; W and bias stay VMEM-resident."""
    o_ref[...] = (
        jnp.dot(x_ref[...], w_ref[...], preferred_element_type=jnp.float32)
        + b_ref[...]
    ).astype(o_ref.dtype)


def linear_pallas(x2d, w, b, *, block_m=BLOCK_M):
    """x2d: (M, K) f32, w: (K, N) f32, b: (1, N) f32 -> (M, N) f32."""
    M, K = x2d.shape
    _, N = w.shape
    grid_m = pl.cdiv(M, block_m)

    bytes_accessed = 4 * (M * K + K * N + N + M * N)  # ~4 MB, f32
    return pl.pallas_call(
        _linear_kernel,
        out_shape=jax.ShapeDtypeStruct((M, N), x2d.dtype),
        grid=(grid_m,),
        in_specs=[
            pl.BlockSpec((block_m, K), lambda i: (i, 0)),  # activations tile
            pl.BlockSpec((K, N), lambda i: (0, 0)),        # weights (constant)
            pl.BlockSpec((1, N), lambda i: (0, 0)),        # bias (constant)
        ],
        out_specs=pl.BlockSpec((block_m, N), lambda i: (i, 0)),
        cost_estimate=pl.CostEstimate(
            flops=2 * M * K * N,
            transcendentals=0,
            bytes_accessed=bytes_accessed,
        ),
        compiler_params=pltpu.CompilerParams(
            # Row blocks are independent -> megacore-shardable on v7x,
            # harmless on single-TC v5e/v6e.
            dimension_semantics=("parallel",),
        ),
    )(x2d, w, b)


def module_forward(x, w, b):
    """Equivalent of M.forward: dropout(p=0) -> linear -> dropout(p=0)."""
    # Dropout with p=0.0 is the identity in both train and eval mode.
    N, H, W, C = x.shape
    x2d = x.reshape(N * H * W, C)
    y2d = linear_pallas(x2d, w, b)
    return y2d.reshape(N, H, W, OUT_FEATURES)


if __name__ == "__main__":
    key = jax.random.PRNGKey(0)
    k_x, k_w, k_b = jax.random.split(key, 3)

    # Input with the shape the module's forward implies.
    x = jax.random.normal(k_x, (1, 14, 14, IN_FEATURES), dtype=jnp.float32)

    # Deterministic parameter init matching nn.Linear's default scheme:
    # uniform(-1/sqrt(in_features), 1/sqrt(in_features)).
    bound = 1.0 / (IN_FEATURES ** 0.5)
    # Stored directly in (in_features, out_features) layout so the kernel does x @ W.
    w = jax.random.uniform(
        k_w, (IN_FEATURES, OUT_FEATURES), minval=-bound, maxval=bound,
        dtype=jnp.float32,
    )
    b = jax.random.uniform(
        k_b, (1, OUT_FEATURES), minval=-bound, maxval=bound, dtype=jnp.float32,
    )

    y = jax.jit(module_forward)(x, w, b)
    y = jax.block_until_ready(y)

    # Cross-check against plain-JAX reference.
    y_ref = x.reshape(-1, IN_FEATURES) @ w + b
    y_ref = y_ref.reshape(1, 14, 14, OUT_FEATURES)
    assert y.shape == (1, 14, 14, OUT_FEATURES)
    assert jnp.allclose(y, y_ref, atol=1e-4, rtol=1e-4)

    print("KERNEL_OK")
</pallas_src>

<mosaic_0001>
module attributes {stable_mosaic.version = 11 : i64} {
  func.func @_linear_kernel(%arg0: i32, %arg1: memref<112x1536xf32, #tpu.memory_space<vmem>>, %arg2: memref<1536x384xf32, #tpu.memory_space<vmem>>, %arg3: memref<1x384xf32, #tpu.memory_space<vmem>>, %arg4: memref<112x384xf32, #tpu.memory_space<vmem>>) attributes {dimension_semantics = [#tpu.dimension_semantics<parallel>], iteration_bounds = array<i64: 2>, scalar_prefetch = 0 : i64, scratch_operands = 0 : i64, tpu.core_type = #tpu.core_type<tc>, window_params = [{transform_indices = @transform_0, window_bounds = array<i64: 112, 1536>}, {pipeline_mode = #tpu.pipeline_mode<synchronous>, transform_indices = @transform_1, window_bounds = array<i64: 1536, 384>}, {pipeline_mode = #tpu.pipeline_mode<synchronous>, transform_indices = @transform_2, window_bounds = array<i64: 1, 384>}, {transform_indices = @transform_3, window_bounds = array<i64: 112, 384>}]} {
    %c0 = arith.constant 0 : index
    %c0_0 = arith.constant 0 : index
    %0 = vector.load %arg1[%c0, %c0_0] : memref<112x1536xf32, #tpu.memory_space<vmem>>, vector<112x1536xf32>
    %c0_1 = arith.constant 0 : index
    %c0_2 = arith.constant 0 : index
    %1 = vector.load %arg2[%c0_1, %c0_2] : memref<1536x384xf32, #tpu.memory_space<vmem>>, vector<1536x384xf32>
    %cst = arith.constant dense<0.000000e+00> : vector<112x384xf32>
    %2 = tpu.matmul %0, %1, %cst {dimension_numbers = #tpu.dot_dimension_numbers<[1], [0], [0], [1], [0, 0, 1, 1], [], []>} : vector<112x1536xf32>, vector<1536x384xf32>, vector<112x384xf32> -> vector<112x384xf32>
    %c0_3 = arith.constant 0 : index
    %c0_4 = arith.constant 0 : index
    %3 = vector.load %arg3[%c0_3, %c0_4] : memref<1x384xf32, #tpu.memory_space<vmem>>, vector<1x384xf32>
    %4 = vector.broadcast %3 : vector<1x384xf32> to vector<112x384xf32>
    %5 = arith.addf %2, %4 : vector<112x384xf32>
    %c0_5 = arith.constant 0 : index
    %c0_6 = arith.constant 0 : index
    %6 = vector.load %arg4[%c0_5, %c0_6] : memref<112x384xf32, #tpu.memory_space<vmem>>, vector<112x384xf32>
    tpu.vector_store %arg4[%c0_5, %c0_6], %5 {strides = array<i32>} : memref<112x384xf32, #tpu.memory_space<vmem>>, vector<112x384xf32>,
    return
  }
  func.func @transform_0(%arg0: i32) -> (i32, i32) {
    %c0_i32 = arith.constant 0 : i32
    %c0_i32_0 = arith.constant 0 : i32
    return %arg0, %c0_i32 : i32, i32
  }
  func.func @transform_1(%arg0: i32) -> (i32, i32) {
    %c0_i32 = arith.constant 0 : i32
    %c0_i32_0 = arith.constant 0 : i32
    %c0_i32_1 = arith.constant 0 : i32
    return %c0_i32, %c0_i32_0 : i32, i32
  }
  func.func @transform_2(%arg0: i32) -> (i32, i32) {
    %c0_i32 = arith.constant 0 : i32
    %c0_i32_0 = arith.constant 0 : i32
    %c0_i32_1 = arith.constant 0 : i32
    return %c0_i32, %c0_i32_0 : i32, i32
  }
  func.func @transform_3(%arg0: i32) -> (i32, i32) {
    %c0_i32 = arith.constant 0 : i32
    %c0_i32_0 = arith.constant 0 : i32
    return %arg0, %c0_i32 : i32, i32
  }
}

</mosaic_0001>

<llo_original>
// kernel: module_forward.1
$region0: #{module_forward.1}
  #allocation0 [shape = 'u32[]', space=smem, size = 0x4, offset = 0x4, fixed_abs, tag = 'smem constant byte address 0x4 - core index']
  #allocation1 [shape = 'u32[144,128]{1,0:T(1,128)}', space=vmem, size = 0x12000, scoped, tag = 'internal scratch']
  %s0 = inlined_call_operand.vmem [shape: f32[196,1536], index: 0, kind: input, shape index: {}]
  %s1 = inlined_call_operand.vmem [shape: f32[1536,384], index: 1, kind: input, shape index: {}]
  %s2 = inlined_call_operand.vmem [shape: f32[1,384], index: 2, kind: input, shape index: {}]
  %s3 = inlined_call_operand.vmem [shape: f32[196,384], index: 3, kind: output, shape index: {}]
  %s4 = sld [smem:[#allocation0]]
  $region71: #{module_forward.1} parent=0
    _
  %s6 = ssub.s32 1, %s4
  %s7 = scalar_select 0, %s6, %s4
  $region1: #{module_forward.1} parent=0
    #allocation2 [shape = 'u8[344064]{0}', space=vmem, size = 0x54000, scoped, tag = 'output window, operand 0']
    loop: start=0, step=1, limit=4
    $region2: #{module_forward.1} parent=1 // loop_pre_header
      _
    $region3: #{module_forward.1} parent=1 // loop_header
      %s9 = sphi 0, %s13
      %p10 = scmp.ge.s32.totalorder %s9, 4
      %s19 = sphi 0, %s21
      %s22 = sphi 0, %s19
      %s23 = sphi 0, %s22
      %s39 = sphi 0, %s23
      %s43 = sphi 0, %s43
      %s45 = sphi 0, %s43
      %s46 = sphi 0, %s45
      %s60 = sphi 0, %s46
      %s64 = sphi 0, %s64
      %s66 = sphi 0, %s64
      %s67 = sphi 0, %s66
      %s81 = sphi 0, %s67
      %s87 = sphi 0, %s89
      %s90 = sphi 0, %s87
      %s91 = sphi 0, %s90
      %s107 = sphi 0, %s91
    $region4: #{module_forward.1} parent=1 // loop_header_branch
      %12 = sbr.rel (%p10) target = $region8
    $region5: #{module_forward.1} parent=1 // loop_body
      %s14 = ssub.s32 %s9, 1
      %s15 = ssub.s32 %s9, 2
      %s16 = sadd.s32 %s9, 1
      %s17 = ssub.s32 %s9, %s16
      %p18 = scmp.eq.s32.totalorder %s17, 0
      %s20 = sadd.s32 %s19, 1
      %s21 = scalar_select %p18, %s19, %s20
      %p24 = pneg %p18
      %p25 = scmp.eq.s32.totalorder %s9, 1
      %p26 = por %p24, %p25
      %p27 = scmp.ne.s32.totalorder %s19, %s22
      %p28 = scmp.eq.s32.totalorder %s9, 0
      %p29 = por %p27, %p28
      %p30 = scmp.ne.s32.totalorder %s19, %s22
      %p31 = scmp.eq.s32.totalorder %s14, 1
      %p32 = por %p30, %p31
      %p33 = scmp.ne.s32.totalorder %s22, %s23
      %p34 = scmp.eq.s32.totalorder %s14, 0
      %p35 = por %p33, %p34
      %p36 = scmp.ne.s32.totalorder %s22, %s23
      %p37 = scmp.eq.s32.totalorder %s15, 1
      %p38 = por %p36, %p37
      %p40 = scmp.ne.s32.totalorder %s23, %s39
      %p41 = scmp.eq.s32.totalorder %s15, 0
      %p42 = por %p40, %p41
      %s44 = sadd.s32 %s43, 1
      %p47 = scmp.eq.s32.totalorder %s9, 1
      %p48 = scmp.ne.s32.totalorder %s43, %s45
      %p49 = scmp.eq.s32.totalorder %s9, 0
      %p50 = por %p48, %p49
      %p51 = scmp.ne.s32.totalorder %s43, %s45
      %p52 = scmp.eq.s32.totalorder %s14, 1
      %p53 = por %p51, %p52
      %p54 = scmp.ne.s32.totalorder %s45, %s46
      %p55 = scmp.eq.s32.totalorder %s14, 0
      %p56 = por %p54, %p55
      %p57 = scmp.ne.s32.totalorder %s45, %s46
      %p58 = scmp.eq.s32.totalorder %s15, 1
      %p59 = por %p57, %p58
      %p61 = scmp.ne.s32.totalorder %s46, %s60
      %p62 = scmp.eq.s32.totalorder %s15, 0
      %p63 = por %p61, %p62
      %s65 = sadd.s32 %s64, 1
      %p68 = scmp.eq.s32.totalorder %s9, 1
      %p69 = scmp.ne.s32.totalorder %s64, %s66
      %p70 = scmp.eq.s32.totalorder %s9, 0
      %p71 = por %p69, %p70
      %p72 = scmp.ne.s32.totalorder %s64, %s66
      %p73 = scmp.eq.s32.totalorder %s14, 1
      %p74 = por %p72, %p73
      %p75 = scmp.ne.s32.totalorder %s66, %s67
      %p76 = scmp.eq.s32.totalorder %s14, 0
      %p77 = por %p75, %p76
      %p78 = scmp.ne.s32.totalorder %s66, %s67
      %p79 = scmp.eq.s32.totalorder %s15, 1
      %p80 = por %p78, %p79
      %p82 = scmp.ne.s32.totalorder %s67, %s81
      %p83 = scmp.eq.s32.totalorder %s15, 0
      %p84 = por %p82, %p83
      %s85 = ssub.s32 %s9, %s16
      %p86 = scmp.eq.s32.totalorder %s85, 0
      %s88 = sadd.s32 %s87, 1
      %s89 = scalar_select %p86, %s87, %s88
      %p92 = pneg %p86
      %p93 = scmp.eq.s32.totalorder %s9, 1
      %p94 = por %p92, %p93
      %p95 = scmp.ne.s32.totalorder %s87, %s90
      %p96 = scmp.eq.s32.totalorder %s9, 0
      %p97 = por %p95, %p96
      %p98 = scmp.ne.s32.totalorder %s87, %s90
      %p99 = scmp.eq.s32.totalorder %s14, 1
      %p100 = por %p98, %p99
      %p101 = scmp.ne.s32.totalorder %s90, %s91
      %p102 = scmp.eq.s32.totalorder %s14, 0
      %p103 = por %p101, %p102
      %p104 = scmp.ne.s32.totalorder %s90, %s91
      %p105 = scmp.eq.s32.totalorder %s15, 1
      %p106 = por %p104, %p105
      %p108 = scmp.ne.s32.totalorder %s91, %s107
      %p109 = scmp.eq.s32.totalorder %s15, 0
      %p110 = por %p108, %p109
      %p111 = scmp.le.s32.totalorder 1, %s9
      %p112 = scmp.lt.s32.totalorder %s9, 3
      %p113 = pnand %p111, %p112
      %p114 = pneg %p113
      // Predicated region
      $region9: #{module_forward.1} parent=5 // pred_check
        _
      $region10: #{module_forward.1} parent=5 // pred_check_branch
        %116 = sbr.rel (%p113) target = $region12
      $region11: #{module_forward.1} parent=5 // pred_region
        %s117 = ssub.s32 %s9, 1
        // Predicated region
        $region13: #{module_forward.1} parent=11 // pred_check
          %p118 = pneg %p56
        $region14: #{module_forward.1} parent=11 // pred_check_branch
          %120 = sbr.rel (%p118) target = $region16
        $region15: #{module_forward.1} parent=11 // pred_region
          _
        $region16: #{module_forward.1} parent=11 // pred_fallthru
          _
        // Predicated region
        $region17: #{module_forward.1} parent=11 // pred_check
          %p121 = pneg %p77
        $region18: #{module_forward.1} parent=11 // pred_check_branch
          %123 = sbr.rel (%p121) target = $region20
        $region19: #{module_forward.1} parent=11 // pred_region
          _
        $region20: #{module_forward.1} parent=11 // pred_fallthru
          _
      $region12: #{module_forward.1} parent=5 // pred_fallthru
        _
      %p124 = scmp.lt.s32.totalorder %s9, 2
      // Predicated region
      $region21: #{module_forward.1} parent=5 // pred_check
        %p125 = pneg %p124
      $region22: #{module_forward.1} parent=5 // pred_check_branch
        %127 = sbr.rel (%p125) target = $region24
      $region23: #{module_forward.1} parent=5 // pred_region
        // Predicated region
        $region25: #{module_forward.1} parent=23 // pred_check
          %p128 = pneg %p29
        $region26: #{module_forward.1} parent=23 // pred_check_branch
          %130 = sbr.rel (%p128) target = $region28
        $region27: #{module_forward.1} parent=23 // pred_region
          %s131 = smul.u32 14, %s9
          %s132 = ssub.s32 25, %s131
          %p133 = scmp.lt.s32.totalorder %s132, 14
          %s134 = scalar_select %p133, %s132, 14
          %s135 = smul.u32 128, %s134
          %s136 = smul.u32 %s135, 12
          %p137 = scmp.lt.s32.totalorder %s131, 24
          %s138 = scalar_select %p137, %s131, 24
          %s139 = smul.addr %s138, 12
          %s140 = smul.addr %s139, 8
          %s141 = scalar_lea.vmem %s0, %s140
          %s142 = smul.u32 14, %s9
          %s143 = ssub.s32 25, %s142
          %p144 = scmp.lt.s32.totalorder %s143, 14
          %s145 = scalar_select %p144, %s143, 14
          %s146 = smul.u32 128, %s145
          %s147 = smul.u32 %s146, 12
        $region28: #{module_forward.1} parent=23 // pred_fallthru
          _
      $region24: #{module_forward.1} parent=5 // pred_fallthru
        _
      %p148 = scmp.le.s32.totalorder 1, %s9
      %p149 = scmp.lt.s32.totalorder %s9, 3
      %p150 = pnand %p148, %p149
      %p151 = pneg %p150
      // Predicated region
      $region29: #{module_forward.1} parent=5 // pred_check
        _
      $region30: #{module_forward.1} parent=5 // pred_check_branch
        %153 = sbr.rel (%p150) target = $region32
      $region31: #{module_forward.1} parent=5 // pred_region
        %s154 = ssub.s32 %s9, 1
        %s155 = smul.u32 14, %s14
        %s156 = ssub.s32 25, %s155
        %p157 = scmp.lt.s32.totalorder %s156, 14
        %s158 = scalar_select %p157, %s156, 14
        %s159 = smul.u32 128, %s158
        %s160 = smul.u32 %s159, 12
        %p161 = scmp.lt.s32.totalorder %s155, 24
        %s162 = scalar_select %p161, %s155, 24
        %s163 = smul.addr %s162, 12
        %s164 = smul.addr %s163, 8
        %s165 = scalar_lea.vmem %s0, %s164
        %p166 = pneg %p35
        %p167 = pneg %p32
        %p168 = pneg %p56
        %p169 = pneg %p53
        %p170 = pneg %p77
        %p171 = pneg %p74
        %p172 = pneg %p103
        %p173 = pneg %p100
        %s174 = sand.u32 %s90, 1
        %s175 = sand.u32 %s90, 1
        %s176 = smul.addr %s175, 336
        %s177 = scalar_lea.vmem [#allocation2], %s176
        %s178 = smul.u32 14, %s14
        %s179 = ssub.s32 25, %s178
        %p180 = scmp.lt.s32.totalorder %s179, 14
        %s181 = scalar_select %p180, %s179, 14
        %s182 = smul.u32 128, %s181
        %s183 = smul.u32 %s182, 12
        %p184 = scmp.lt.s32.totalorder %s178, 24
        %s185 = scalar_select %p184, %s178, 24
        %s186 = smul.addr %s185, 12
        %s187 = smul.addr %s186, 8
        %s188 = scalar_lea.vmem %s0, %s187
        %s189 = smul.u32 14, %s14
        %s190 = ssub.s32 25, %s189
        %p191 = scmp.lt.s32.totalorder %s190, 14
        %s192 = scalar_select %p191, %s190, 14
        %s193 = smul.u32 128, %s192
        %s194 = smul.u32 %s193, 12
        %s195 = smul.u32 14, %s14
        %s196 = ssub.s32 25, %s195
        %p197 = scmp.lt.s32.totalorder %s196, 14
        %s198 = scalar_select %p197, %s196, 14
        %s199 = smul.u32 128, %s198
        %s200 = smul.u32 %s199, 3
        %v201 = vld [vmem:[%s188] sm:$0xff]
        %v202 = vld [vmem:[%s188 + $0x8] sm:$0xff]
        %v203 = vld [vmem:[%s188 + $0x10] sm:$0xff]
        %v204 = vld [vmem:[%s188 + $0x18] sm:$0xff]
        %v205 = vld [vmem:[%s188 + $0x20] sm:$0xff]
        %v206 = vld [vmem:[%s188 + $0x28] sm:$0xff]
        %v207 = vld [vmem:[%s188 + $0x30] sm:$0xff]
        %v208 = vld [vmem:[%s188 + $0x38] sm:$0xff]
        %v209 = vld [vmem:[%s188 + $0x40] sm:$0xff]
        %v210 = vld [vmem:[%s188 + $0x48] sm:$0xff]
        %v211 = vld [vmem:[%s188 + $0x50] sm:$0xff]
        %v212 = vld [vmem:[%s188 + $0x58] sm:$0xff]
        %v213 = vld [vmem:[%s188 + $0x60] sm:$0xff]
        %v214 = vld [vmem:[%s188 + $0x68] sm:$0xff]
        %v215 = vld [vmem:[%s188 + $0x70] sm:$0xff]
        %v216 = vld [vmem:[%s188 + $0x78] sm:$0xff]
        %v217 = vld [vmem:[%s188 + $0x80] sm:$0xff]
        %v218 = vld [vmem:[%s188 + $0x88] sm:$0xff]
        %v219 = vld [vmem:[%s188 + $0x90] sm:$0xff]
        %v220 = vld [vmem:[%s188 + $0x98] sm:$0xff]
        %v221 = vld [vmem:[%s188 + $0xa0] sm:$0xff]
        %v222 = vld [vmem:[%s188 + $0xa8] sm:$0xff]
        %v223 = vld [vmem:[%s188 + $0xb0] sm:$0xff]
        %v224 = vld [vmem:[%s188 + $0xb8] sm:$0xff]
        %v225 = vld [vmem:[%s188 + $0xc0] sm:$0xff]
        %v226 = vld [vmem:[%s188 + $0xc8] sm:$0xff]
        %v227 = vld [vmem:[%s188 + $0xd0] sm:$0xff]
        %v228 = vld [vmem:[%s188 + $0xd8] sm:$0xff]
        %v229 = vld [vmem:[%s188 + $0xe0] sm:$0xff]
        %v230 = vld [vmem:[%s188 + $0xe8] sm:$0xff]
        %v231 = vld [vmem:[%s188 + $0xf0] sm:$0xff]
        %v232 = vld [vmem:[%s188 + $0xf8] sm:$0xff]
        %v233 = vld [vmem:[%s188 + $0x100] sm:$0xff]
        %v234 = vld [vmem:[%s188 + $0x108] sm:$0xff]
        %v235 = vld [vmem:[%s188 + $0x110] sm:$0xff]
        %v236 = vld [vmem:[%s188 + $0x118] sm:$0xff]
        %v237 = vld [vmem:[%s188 + $0x120] sm:$0xff]
        %v238 = vld [vmem:[%s188 + $0x128] sm:$0xff]
        %v239 = vld [vmem:[%s188 + $0x130] sm:$0xff]
        %v240 = vld [vmem:[%s188 + $0x138] sm:$0xff]
        %v241 = vld [vmem:[%s188 + $0x140] sm:$0xff]
        %v242 = vld [vmem:[%s188 + $0x148] sm:$0xff]
        %v243 = vld [vmem:[%s188 + $0x150] sm:$0xff]
        %v244 = vld [vmem:[%s188 + $0x158] sm:$0xff]
        %v245 = vld [vmem:[%s188 + $0x160] sm:$0xff]
        %v246 = vld [vmem:[%s188 + $0x168] sm:$0xff]
        %v247 = vld [vmem:[%s188 + $0x170] sm:$0xff]
        %v248 = vld [vmem:[%s188 + $0x178] sm:$0xff]
        %v249 = vld [vmem:[%s188 + $0x180] sm:$0xff]
        %v250 = vld [vmem:[%s188 + $0x188] sm:$0xff]
        %v251 = vld [vmem:[%s188 + $0x190] sm:$0xff]
        %v252 = vld [vmem:[%s188 + $0x198] sm:$0xff]
        %v253 = vld [vmem:[%s188 + $0x1a0] sm:$0xff]
        %v254 = vld [vmem:[%s188 + $0x1a8] sm:$0xff]
        %v255 = vld [vmem:[%s188 + $0x1b0] sm:$0xff]
        %v256 = vld [vmem:[%s188 + $0x1b8] sm:$0xff]
        %v257 = vld [vmem:[%s188 + $0x1c0] sm:$0xff]
        %v258 = vld [vmem:[%s188 + $0x1c8] sm:$0xff]
        %v259 = vld [vmem:[%s188 + $0x1d0] sm:$0xff]
        %v260 = vld [vmem:[%s188 + $0x1d8] sm:$0xff]
        %v261 = vld [vmem:[%s188 + $0x1e0] sm:$0xff]
        %v262 = vld [vmem:[%s188 + $0x1e8] sm:$0xff]
        %v263 = vld [vmem:[%s188 + $0x1f0] sm:$0xff]
        %v264 = vld [vmem:[%s188 + $0x1f8] sm:$0xff]
        %v265 = vld [vmem:[%s188 + $0x200] sm:$0xff]
        %v266 = vld [vmem:[%s188 + $0x208] sm:$0xff]
        %v267 = vld [vmem:[%s188 + $0x210] sm:$0xff]
        %v268 = vld [vmem:[%s188 + $0x218] sm:$0xff]
        %v269 = vld [vmem:[%s188 + $0x220] sm:$0xff]
        %v270 = vld [vmem:[%s188 + $0x228] sm:$0xff]
        %v271 = vld [vmem:[%s188 + $0x230] sm:$0xff]
        %v272 = vld [vmem:[%s188 + $0x238] sm:$0xff]
        %v273 = vld [vmem:[%s188 + $0x240] sm:$0xff]
        %v274 = vld [vmem:[%s188 + $0x248] sm:$0xff]
        %v275 = vld [vmem:[%s188 + $0x250] sm:$0xff]
        %v276 = vld [vmem:[%s188 + $0x258] sm:$0xff]
        %v277 = vld [vmem:[%s188 + $0x260] sm:$0xff]
        %v278 = vld [vmem:[%s188 + $0x268] sm:$0xff]
        %v279 = vld [vmem:[%s188 + $0x270] sm:$0xff]
        %v280 = vld [vmem:[%s188 + $0x278] sm:$0xff]
        %v281 = vld [vmem:[%s188 + $0x280] sm:$0xff]
        %v282 = vld [vmem:[%s188 + $0x288] sm:$0xff]
        %v283 = vld [vmem:[%s188 + $0x290] sm:$0xff]
        %v284 = vld [vmem:[%s188 + $0x298] sm:$0xff]
        %v285 = vld [vmem:[%s188 + $0x2a0] sm:$0xff]
        %v286 = vld [vmem:[%s188 + $0x2a8] sm:$0xff]
        %v287 = vld [vmem:[%s188 + $0x2b0] sm:$0xff]
        %v288 = vld [vmem:[%s188 + $0x2b8] sm:$0xff]
        %v289 = vld [vmem:[%s188 + $0x2c0] sm:$0xff]
        %v290 = vld [vmem:[%s188 + $0x2c8] sm:$0xff]
        %v291 = vld [vmem:[%s188 + $0x2d0] sm:$0xff]
        %v292 = vld [vmem:[%s188 + $0x2d8] sm:$0xff]
        %v293 = vld [vmem:[%s188 + $0x2e0] sm:$0xff]
        %v294 = vld [vmem:[%s188 + $0x2e8] sm:$0xff]
        %v295 = vld [vmem:[%s188 + $0x2f0] sm:$0xff]
        %v296 = vld [vmem:[%s188 + $0x2f8] sm:$0xff]
        %v297 = vld [vmem:[%s188 + $0x300] sm:$0xff]
        %v298 = vld [vmem:[%s188 + $0x308] sm:$0xff]
        %v299 = vld [vmem:[%s188 + $0x310] sm:$0xff]
        %v300 = vld [vmem:[%s188 + $0x318] sm:$0xff]
        %v301 = vld [vmem:[%s188 + $0x320] sm:$0xff]
        %v302 = vld [vmem:[%s188 + $0x328] sm:$0xff]
        %v303 = vld [vmem:[%s188 + $0x330] sm:$0xff]
        %v304 = vld [vmem:[%s188 + $0x338] sm:$0xff]
        %v305 = vld [vmem:[%s188 + $0x340] sm:$0xff]
        %v306 = vld [vmem:[%s188 + $0x348] sm:$0xff]
        %v307 = vld [vmem:[%s188 + $0x350] sm:$0xff]
        %v308 = vld [vmem:[%s188 + $0x358] sm:$0xff]
        %v309 = vld [vmem:[%s188 + $0x360] sm:$0xff]
        %v310 = vld [vmem:[%s188 + $0x368] sm:$0xff]
        %v311 = vld [vmem:[%s188 + $0x370] sm:$0xff]
        %v312 = vld [vmem:[%s188 + $0x378] sm:$0xff]
        %v313 = vld [vmem:[%s188 + $0x380] sm:$0xff]
        %v314 = vld [vmem:[%s188 + $0x388] sm:$0xff]
        %v315 = vld [vmem:[%s188 + $0x390] sm:$0xff]
        %v316 = vld [vmem:[%s188 + $0x398] sm:$0xff]
        %v317 = vld [vmem:[%s188 + $0x3a0] sm:$0xff]
        %v318 = vld [vmem:[%s188 + $0x3a8] sm:$0xff]
        %v319 = vld [vmem:[%s188 + $0x3b0] sm:$0xff]
        %v320 = vld [vmem:[%s188 + $0x3b8] sm:$0xff]
        %v321 = vld [vmem:[%s188 + $0x3c0] sm:$0xff]
        %v322 = vld [vmem:[%s188 + $0x3c8] sm:$0xff]
        %v323 = vld [vmem:[%s188 + $0x3d0] sm:$0xff]
        %v324 = vld [vmem:[%s188 + $0x3d8] sm:$0xff]
        %v325 = vld [vmem:[%s188 + $0x3e0] sm:$0xff]
        %v326 = vld [vmem:[%s188 + $0x3e8] sm:$0xff]
        %v327 = vld [vmem:[%s188 + $0x3f0] sm:$0xff]
        %v328 = vld [vmem:[%s188 + $0x3f8] sm:$0xff]
        %v329 = vld [vmem:[%s188 + $0x400] sm:$0xff]
        %v330 = vld [vmem:[%s188 + $0x408] sm:$0xff]
        %v331 = vld [vmem:[%s188 + $0x410] sm:$0xff]
        %v332 = vld [vmem:[%s188 + $0x418] sm:$0xff]
        %v333 = vld [vmem:[%s188 + $0x420] sm:$0xff]
        %v334 = vld [vmem:[%s188 + $0x428] sm:$0xff]
        %v335 = vld [vmem:[%s188 + $0x430] sm:$0xff]
        %v336 = vld [vmem:[%s188 + $0x438] sm:$0xff]
        %v337 = vld [vmem:[%s188 + $0x440] sm:$0xff]
        %v338 = vld [vmem:[%s188 + $0x448] sm:$0xff]
        %v339 = vld [vmem:[%s188 + $0x450] sm:$0xff]
        %v340 = vld [vmem:[%s188 + $0x458] sm:$0xff]
        %v341 = vld [vmem:[%s188 + $0x460] sm:$0xff]
        %v342 = vld [vmem:[%s188 + $0x468] sm:$0xff]
        %v343 = vld [vmem:[%s188 + $0x470] sm:$0xff]
        %v344 = vld [vmem:[%s188 + $0x478] sm:$0xff]
        %v345 = vld [vmem:[%s188 + $0x480] sm:$0xff]
        %v346 = vld [vmem:[%s188 + $0x488] sm:$0xff]
        %v347 = vld [vmem:[%s188 + $0x490] sm:$0xff]
        %v348 = vld [vmem:[%s188 + $0x498] sm:$0xff]
        %v349 = vld [vmem:[%s188 + $0x4a0] sm:$0xff]
        %v350 = vld [vmem:[%s188 + $0x4a8] sm:$0xff]
        %v351 = vld [vmem:[%s188 + $0x4b0] sm:$0xff]
        %v352 = vld [vmem:[%s188 + $0x4b8] sm:$0xff]
        %v353 = vld [vmem:[%s188 + $0x4c0] sm:$0xff]
        %v354 = vld [vmem:[%s188 + $0x4c8] sm:$0xff]
        %v355 = vld [vmem:[%s188 + $0x4d0] sm:$0xff]
        %v356 = vld [vmem:[%s188 + $0x4d8] sm:$0xff]
        %v357 = vld [vmem:[%s188 + $0x4e0] sm:$0xff]
        %v358 = vld [vmem:[%s188 + $0x4e8] sm:$0xff]
        %v359 = vld [vmem:[%s188 + $0x4f0] sm:$0xff]
        %v360 = vld [vmem:[%s188 + $0x4f8] sm:$0xff]
        %v361 = vld [vmem:[%s188 + $0x500] sm:$0xff]
        %v362 = vld [vmem:[%s188 + $0x508] sm:$0xff]
        %v363 = vld [vmem:[%s188 + $0x510] sm:$0xff]
        %v364 = vld [vmem:[%s188 + $0x518] sm:$0xff]
        %v365 = vld [vmem:[%s188 + $0x520] sm:$0xff]
        %v366 = vld [vmem:[%s188 + $0x528] sm:$0xff]
        %v367 = vld [vmem:[%s188 + $0x530] sm:$0xff]
        %v368 = vld [vmem:[%s188 + $0x538] sm:$0xff]
        %v369 = vld [vmem:[%s1] sm:$0xff]
        %v370 = vld [vmem:[%s1 + $0x8] sm:$0xff]
        %v371 = vld [vmem:[%s1 + $0x10] sm:$0xff]
        %v372 = vld [vmem:[%s1 + $0x18] sm:$0xff]
        %v373 = vld [vmem:[%s1 + $0x20] sm:$0xff]
        %v374 = vld [vmem:[%s1 + $0x28] sm:$0xff]
        %v375 = vld [vmem:[%s1 + $0x30] sm:$0xff]
        %v376 = vld [vmem:[%s1 + $0x38] sm:$0xff]
        %v377 = vld [vmem:[%s1 + $0x40] sm:$0xff]
        %v378 = vld [vmem:[%s1 + $0x48] sm:$0xff]
        %v379 = vld [vmem:[%s1 + $0x50] sm:$0xff]
        %v380 = vld [vmem:[%s1 + $0x58] sm:$0xff]
        %v381 = vld [vmem:[%s1 + $0x60] sm:$0xff]
        %v382 = vld [vmem:[%s1 + $0x68] sm:$0xff]
        %v383 = vld [vmem:[%s1 + $0x70] sm:$0xff]
        %v384 = vld [vmem:[%s1 + $0x78] sm:$0xff]
        %v385 = vld [vmem:[%s1 + $0x80] sm:$0xff]
        %v386 = vld [vmem:[%s1 + $0x88] sm:$0xff]
        %v387 = vld [vmem:[%s1 + $0x90] sm:$0xff]
        %v388 = vld [vmem:[%s1 + $0x98] sm:$0xff]
        %v389 = vld [vmem:[%s1 + $0xa0] sm:$0xff]
        %v390 = vld [vmem:[%s1 + $0xa8] sm:$0xff]
        %v391 = vld [vmem:[%s1 + $0xb0] sm:$0xff]
        %v392 = vld [vmem:[%s1 + $0xb8] sm:$0xff]
        %v393 = vld [vmem:[%s1 + $0xc0] sm:$0xff]
        %v394 = vld [vmem:[%s1 + $0xc8] sm:$0xff]
        %v395 = vld [vmem:[%s1 + $0xd0] sm:$0xff]
        %v396 = vld [vmem:[%s1 + $0xd8] sm:$0xff]
        %v397 = vld [vmem:[%s1 + $0xe0] sm:$0xff]
        %v398 = vld [vmem:[%s1 + $0xe8] sm:$0xff]
        %v399 = vld [vmem:[%s1 + $0xf0] sm:$0xff]
        %v400 = vld [vmem:[%s1 + $0xf8] sm:$0xff]
        %v401 = vld [vmem:[%s1 + $0x100] sm:$0xff]
        %v402 = vld [vmem:[%s1 + $0x108] sm:$0xff]
        %v403 = vld [vmem:[%s1 + $0x110] sm:$0xff]
        %v404 = vld [vmem:[%s1 + $0x118] sm:$0xff]
        %v405 = vld [vmem:[%s1 + $0x120] sm:$0xff]
        %v406 = vld [vmem:[%s1 + $0x128] sm:$0xff]
        %v407 = vld [vmem:[%s1 + $0x130] sm:$0xff]
        %v408 = vld [vmem:[%s1 + $0x138] sm:$0xff]
        %v409 = vld [vmem:[%s1 + $0x140] sm:$0xff]
        %v410 = vld [vmem:[%s1 + $0x148] sm:$0xff]
        %v411 = vld [vmem:[%s1 + $0x150] sm:$0xff]
        %v412 = vld [vmem:[%s1 + $0x158] sm:$0xff]
        %v413 = vld [vmem:[%s1 + $0x160] sm:$0xff]
        %v414 = vld [vmem:[%s1 + $0x168] sm:$0xff]
        %v415 = vld [vmem:[%s1 + $0x170] sm:$0xff]
        %v416 = vld [vmem:[%s1 + $0x178] sm:$0xff]
        %v417 = vld [vmem:[%s1 + $0x180] sm:$0xff]
        %v418 = vld [vmem:[%s1 + $0x188] sm:$0xff]
        %v419 = vld [vmem:[%s1 + $0x190] sm:$0xff]
        %v420 = vld [vmem:[%s1 + $0x198] sm:$0xff]
        %v421 = vld [vmem:[%s1 + $0x1a0] sm:$0xff]
        %v422 = vld [vmem:[%s1 + $0x1a8] sm:$0xff]
        %v423 = vld [vmem:[%s1 + $0x1b0] sm:$0xff]
        %v424 = vld [vmem:[%s1 + $0x1b8] sm:$0xff]
        %v425 = vld [vmem:[%s1 + $0x1c0] sm:$0xff]
        %v426 = vld [vmem:[%s1 + $0x1c8] sm:$0xff]
        %v427 = vld [vmem:[%s1 + $0x1d0] sm:$0xff]
        %v428 = vld [vmem:[%s1 + $0x1d8] sm:$0xff]
        %v429 = vld [vmem:[%s1 + $0x1e0] sm:$0xff]
        %v430 = vld [vmem:[%s1 + $0x1e8] sm:$0xff]
        %v431 = vld [vmem:[%s1 + $0x1f0] sm:$0xff]
        %v432 = vld [vmem:[%s1 + $0x1f8] sm:$0xff]
        %v433 = vld [vmem:[%s1 + $0x200] sm:$0xff]
        %v434 = vld [vmem:[%s1 + $0x208] sm:$0xff]
        %v435 = vld [vmem:[%s1 + $0x210] sm:$0xff]
        %v436 = vld [vmem:[%s1 + $0x218] sm:$0xff]
        %v437 = vld [vmem:[%s1 + $0x220] sm:$0xff]
        %v438 = vld [vmem:[%s1 + $0x228] sm:$0xff]
        %v439 = vld [vmem:[%s1 + $0x230] sm:$0xff]
        %v440 = vld [vmem:[%s1 + $0x238] sm:$0xff]
        %v441 = vld [vmem:[%s1 + $0x240] sm:$0xff]
        %v442 = vld [vmem:[%s1 + $0x248] sm:$0xff]
        %v443 = vld [vmem:[%s1 + $0x250] sm:$0xff]
        %v444 = vld [vmem:[%s1 + $0x258] sm:$0xff]
        %v445 = vld [vmem:[%s1 + $0x260] sm:$0xff]
        %v446 = vld [vmem:[%s1 + $0x268] sm:$0xff]
        %v447 = vld [vmem:[%s1 + $0x270] sm:$0xff]
        %v448 = vld [vmem:[%s1 + $0x278] sm:$0xff]
        %v449 = vld [vmem:[%s1 + $0x280] sm:$0xff]
        %v450 = vld [vmem:[%s1 + $0x288] sm:$0xff]
        %v451 = vld [vmem:[%s1 + $0x290] sm:$0xff]
        %v452 = vld [vmem:[%s1 + $0x298] sm:$0xff]
        %v453 = vld [vmem:[%s1 + $0x2a0] sm:$0xff]
        %v454 = vld [vmem:[%s1 + $0x2a8] sm:$0xff]
        %v455 = vld [vmem:[%s1 + $0x2b0] sm:$0xff]
        %v456 = vld [vmem:[%s1 + $0x2b8] sm:$0xff]
        %v457 = vld [vmem:[%s1 + $0x2c0] sm:$0xff]
        %v458 = vld [vmem:[%s1 + $0x2c8] sm:$0xff]
        %v459 = vld [vmem:[%s1 + $0x2d0] sm:$0xff]
        %v460 = vld [vmem:[%s1 + $0x2d8] sm:$0xff]
        %v461 = vld [vmem:[%s1 + $0x2e0] sm:$0xff]
        %v462 = vld [vmem:[%s1 + $0x2e8] sm:$0xff]
        %v463 = vld [vmem:[%s1 + $0x2f0] sm:$0xff]
        %v464 = vld [vmem:[%s1 + $0x2f8] sm:$0xff]
        %v465 = vld [vmem:[%s1 + $0x300] sm:$0xff]
        %v466 = vld [vmem:[%s1 + $0x308] sm:$0xff]
        %v467 = vld [vmem:[%s1 + $0x310] sm:$0xff]
        %v468 = vld [vmem:[%s1 + $0x318] sm:$0xff]
        %v469 = vld [vmem:[%s1 + $0x320] sm:$0xff]
        %v470 = vld [vmem:[%s1 + $0x328] sm:$0xff]
        %v471 = vld [vmem:[%s1 + $0x330] sm:$0xff]
        %v472 = vld [vmem:[%s1 + $0x338] sm:$0xff]
        %v473 = vld [vmem:[%s1 + $0x340] sm:$0xff]
        %v474 = vld [vmem:[%s1 + $0x348] sm:$0xff]
        %v475 = vld [vmem:[%s1 + $0x350] sm:$0xff]
        %v476 = vld [vmem:[%s1 + $0x358] sm:$0xff]
        %v477 = vld [vmem:[%s1 + $0x360] sm:$0xff]
        %v478 = vld [vmem:[%s1 + $0x368] sm:$0xff]
        %v479 = vld [vmem:[%s1 + $0x370] sm:$0xff]
        %v480 = vld [vmem:[%s1 + $0x378] sm:$0xff]
        %v481 = vld [vmem:[%s1 + $0x380] sm:$0xff]
        %v482 = vld [vmem:[%s1 + $0x388] sm:$0xff]
        %v483 = vld [vmem:[%s1 + $0x390] sm:$0xff]
        %v484 = vld [vmem:[%s1 + $0x398] sm:$0xff]
        %v485 = vld [vmem:[%s1 + $0x3a0] sm:$0xff]
        %v486 = vld [vmem:[%s1 + $0x3a8] sm:$0xff]
        %v487 = vld [vmem:[%s1 + $0x3b0] sm:$0xff]
        %v488 = vld [vmem:[%s1 + $0x3b8] sm:$0xff]
        %v489 = vld [vmem:[%s1 + $0x3c0] sm:$0xff]
        %v490 = vld [vmem:[%s1 + $0x3c8] sm:$0xff]
        %v491 = vld [vmem:[%s1 + $0x3d0] sm:$0xff]
        %v492 = vld [vmem:[%s1 + $0x3d8] sm:$0xff]
        %v493 = vld [vmem:[%s1 + $0x3e0] sm:$0xff]
        %v494 = vld [vmem:[%s1 + $0x3e8] sm:$0xff]
        %v495 = vld [vmem:[%s1 + $0x3f0] sm:$0xff]
        %v496 = vld [vmem:[%s1 + $0x3f8] sm:$0xff]
        %v497 = vld [vmem:[%s1 + $0x400] sm:$0xff]
        %v498 = vld [vmem:[%s1 + $0x408] sm:$0xff]
        %v499 = vld [vmem:[%s1 + $0x410] sm:$0xff]
        %v500 = vld [vmem:[%s1 + $0x418] sm:$0xff]
        %v501 = vld [vmem:[%s1 + $0x420] sm:$0xff]
        %v502 = vld [vmem:[%s1 + $0x428] sm:$0xff]
        %v503 = vld [vmem:[%s1 + $0x430] sm:$0xff]
        %v504 = vld [vmem:[%s1 + $0x438] sm:$0xff]
        %v505 = vld [vmem:[%s1 + $0x440] sm:$0xff]
        %v506 = vld [vmem:[%s1 + $0x448] sm:$0xff]
        %v507 = vld [vmem:[%s1 + $0x450] sm:$0xff]
        %v508 = vld [vmem:[%s1 + $0x458] sm:$0xff]
        %v509 = vld [vmem:[%s1 + $0x460] sm:$0xff]
        %v510 = vld [vmem:[%s1 + $0x468] sm:$0xff]
        %v511 = vld [vmem:[%s1 + $0x470] sm:$0xff]
        %v512 = vld [vmem:[%s1 + $0x478] sm:$0xff]
        %v513 = vld [vmem:[%s1 + $0x480] sm:$0xff]
        %v514 = vld [vmem:[%s1 + $0x488] sm:$0xff]
        %v515 = vld [vmem:[%s1 + $0x490] sm:$0xff]
        %v516 = vld [vmem:[%s1 + $0x498] sm:$0xff]
        %v517 = vld [vmem:[%s1 + $0x4a0] sm:$0xff]
        %v518 = vld [vmem:[%s1 + $0x4a8] sm:$0xff]
        %v519 = vld [vmem:[%s1 + $0x4b0] sm:$0xff]
        %v520 = vld [vmem:[%s1 + $0x4b8] sm:$0xff]
        %v521 = vld [vmem:[%s1 + $0x4c0] sm:$0xff]
        %v522 = vld [vmem:[%s1 + $0x4c8] sm:$0xff]
        %v523 = vld [vmem:[%s1 + $0x4d0] sm:$0xff]
        %v524 = vld [vmem:[%s1 + $0x4d8] sm:$0xff]
        %v525 = vld [vmem:[%s1 + $0x4e0] sm:$0xff]
        %v526 = vld [vmem:[%s1 + $0x4e8] sm:$0xff]
        %v527 = vld [vmem:[%s1 + $0x4f0] sm:$0xff]
        %v528 = vld [vmem:[%s1 + $0x4f8] sm:$0xff]
        %v529 = vld [vmem:[%s1 + $0x500] sm:$0xff]
        %v530 = vld [vmem:[%s1 + $0x508] sm:$0xff]
        %v531 = vld [vmem:[%s1 + $0x510] sm:$0xff]
        %v532 = vld [vmem:[%s1 + $0x518] sm:$0xff]
        %v533 = vld [vmem:[%s1 + $0x520] sm:$0xff]
        %v534 = vld [vmem:[%s1 + $0x528] sm:$0xff]
        %v535 = vld [vmem:[%s1 + $0x530] sm:$0xff]
        %v536 = vld [vmem:[%s1 + $0x538] sm:$0xff]
        %v537 = vld [vmem:[%s1 + $0x540] sm:$0xff]
        %v538 = vld [vmem:[%s1 + $0x548] sm:$0xff]
        %v539 = vld [vmem:[%s1 + $0x550] sm:$0xff]
        %v540 = vld [vmem:[%s1 + $0x558] sm:$0xff]
        %v541 = vld [vmem:[%s1 + $0x560] sm:$0xff]
        %v542 = vld [vmem:[%s1 + $0x568] sm:$0xff]
        %v543 = vld [vmem:[%s1 + $0x570] sm:$0xff]
        %v544 = vld [vmem:[%s1 + $0x578] sm:$0xff]
        %v545 = vld [vmem:[%s1 + $0x580] sm:$0xff]
        %v546 = vld [vmem:[%s1 + $0x588] sm:$0xff]
        %v547 = vld [vmem:[%s1 + $0x590] sm:$0xff]
        %v548 = vld [vmem:[%s1 + $0x598] sm:$0xff]
        %v549 = vld [vmem:[%s1 + $0x5a0] sm:$0xff]
        %v550 = vld [vmem:[%s1 + $0x5a8] sm:$0xff]
        %v551 = vld [vmem:[%s1 + $0x5b0] sm:$0xff]
        %v552 = vld [vmem:[%s1 + $0x5b8] sm:$0xff]
        %v553 = vld [vmem:[%s1 + $0x5c0] sm:$0xff]
        %v554 = vld [vmem:[%s1 + $0x5c8] sm:$0xff]
        %v555 = vld [vmem:[%s1 + $0x5d0] sm:$0xff]
        %v556 = vld [vmem:[%s1 + $0x5d8] sm:$0xff]
        %v557 = vld [vmem:[%s1 + $0x5e0] sm:$0xff]
        %v558 = vld [vmem:[%s1 + $0x5e8] sm:$0xff]
        %v559 = vld [vmem:[%s1 + $0x5f0] sm:$0xff]
        %v560 = vld [vmem:[%s1 + $0x5f8] sm:$0xff]
        %v561 = vld [vmem:[%s1 + $0x600] sm:$0xff]
        %v562 = vld [vmem:[%s1 + $0x608] sm:$0xff]
        %v563 = vld [vmem:[%s1 + $0x610] sm:$0xff]
        %v564 = vld [vmem:[%s1 + $0x618] sm:$0xff]
        %v565 = vld [vmem:[%s1 + $0x620] sm:$0xff]
        %v566 = vld [vmem:[%s1 + $0x628] sm:$0xff]
        %v567 = vld [vmem:[%s1 + $0x630] sm:$0xff]
        %v568 = vld [vmem:[%s1 + $0x638] sm:$0xff]
        %v569 = vld [vmem:[%s1 + $0x640] sm:$0xff]
        %v570 = vld [vmem:[%s1 + $0x648] sm:$0xff]
        %v571 = vld [vmem:[%s1 + $0x650] sm:$0xff]
        %v572 = vld [vmem:[%s1 + $0x658] sm:$0xff]
        %v573 = vld [vmem:[%s1 + $0x660] sm:$0xff]
        %v574 = vld [vmem:[%s1 + $0x668] sm:$0xff]
        %v575 = vld [vmem:[%s1 + $0x670] sm:$0xff]
        %v576 = vld [vmem:[%s1 + $0x678] sm:$0xff]
        %v577 = vld [vmem:[%s1 + $0x680] sm:$0xff]
        %v578 = vld [vmem:[%s1 + $0x688] sm:$0xff]
        %v579 = vld [vmem:[%s1 + $0x690] sm:$0xff]
        %v580 = vld [vmem:[%s1 + $0x698] sm:$0xff]
        %v581 = vld [vmem:[%s1 + $0x6a0] sm:$0xff]
        %v582 = vld [vmem:[%s1 + $0x6a8] sm:$0xff]
        %v583 = vld [vmem:[%s1 + $0x6b0] sm:$0xff]
        %v584 = vld [vmem:[%s1 + $0x6b8] sm:$0xff]
        %v585 = vld [vmem:[%s1 + $0x6c0] sm:$0xff]
        %v586 = vld [vmem:[%s1 + $0x6c8] sm:$0xff]
        %v587 = vld [vmem:[%s1 + $0x6d0] sm:$0xff]
        %v588 = vld [vmem:[%s1 + $0x6d8] sm:$0xff]
        %v589 = vld [vmem:[%s1 + $0x6e0] sm:$0xff]
        %v590 = vld [vmem:[%s1 + $0x6e8] sm:$0xff]
        %v591 = vld [vmem:[%s1 + $0x6f0] sm:$0xff]
        %v592 = vld [vmem:[%s1 + $0x6f8] sm:$0xff]
        %v593 = vld [vmem:[%s1 + $0x700] sm:$0xff]
        %v594 = vld [vmem:[%s1 + $0x708] sm:$0xff]
        %v595 = vld [vmem:[%s1 + $0x710] sm:$0xff]
        %v596 = vld [vmem:[%s1 + $0x718] sm:$0xff]
        %v597 = vld [vmem:[%s1 + $0x720] sm:$0xff]
        %v598 = vld [vmem:[%s1 + $0x728] sm:$0xff]
        %v599 = vld [vmem:[%s1 + $0x730] sm:$0xff]
        %v600 = vld [vmem:[%s1 + $0x738] sm:$0xff]
        %v601 = vld [vmem:[%s1 + $0x740] sm:$0xff]
        %v602 = vld [vmem:[%s1 + $0x748] sm:$0xff]
        %v603 = vld [vmem:[%s1 + $0x750] sm:$0xff]
        %v604 = vld [vmem:[%s1 + $0x758] sm:$0xff]
        %v605 = vld [vmem:[%s1 + $0x760] sm:$0xff]
        %v606 = vld [vmem:[%s1 + $0x768] sm:$0xff]
        %v607 = vld [vmem:[%s1 + $0x770] sm:$0xff]
        %v608 = vld [vmem:[%s1 + $0x778] sm:$0xff]
        %v609 = vld [vmem:[%s1 + $0x780] sm:$0xff]
        %v610 = vld [vmem:[%s1 + $0x788] sm:$0xff]
        %v611 = vld [vmem:[%s1 + $0x790] sm:$0xff]
        %v612 = vld [vmem:[%s1 + $0x798] sm:$0xff]
        %v613 = vld [vmem:[%s1 + $0x7a0] sm:$0xff]
        %v614 = vld [vmem:[%s1 + $0x7a8] sm:$0xff]
        %v615 = vld [vmem:[%s1 + $0x7b0] sm:$0xff]
        %v616 = vld [vmem:[%s1 + $0x7b8] sm:$0xff]
        %v617 = vld [vmem:[%s1 + $0x7c0] sm:$0xff]
        %v618 = vld [vmem:[%s1 + $0x7c8] sm:$0xff]
        %v619 = vld [vmem:[%s1 + $0x7d0] sm:$0xff]
        %v620 = vld [vmem:[%s1 + $0x7d8] sm:$0xff]
        %v621 = vld [vmem:[%s1 + $0x7e0] sm:$0xff]
        %v622 = vld [vmem:[%s1 + $0x7e8] sm:$0xff]
        %v623 = vld [vmem:[%s1 + $0x7f0] sm:$0xff]
        %v624 = vld [vmem:[%s1 + $0x7f8] sm:$0xff]
        %v625 = vld [vmem:[%s1 + $0x800] sm:$0xff]
        %v626 = vld [vmem:[%s1 + $0x808] sm:$0xff]
        %v627 = vld [vmem:[%s1 + $0x810] sm:$0xff]
        %v628 = vld [vmem:[%s1 + $0x818] sm:$0xff]
        %v629 = vld [vmem:[%s1 + $0x820] sm:$0xff]
        %v630 = vld [vmem:[%s1 + $0x828] sm:$0xff]
        %v631 = vld [vmem:[%s1 + $0x830] sm:$0xff]
        %v632 = vld [vmem:[%s1 + $0x838] sm:$0xff]
        %v633 = vld [vmem:[%s1 + $0x840] sm:$0xff]
        %v634 = vld [vmem:[%s1 + $0x848] sm:$0xff]
        %v635 = vld [vmem:[%s1 + $0x850] sm:$0xff]
        %v636 = vld [vmem:[%s1 + $0x858] sm:$0xff]
        %v637 = vld [vmem:[%s1 + $0x860] sm:$0xff]
        %v638 = vld [vmem:[%s1 + $0x868] sm:$0xff]
        %v639 = vld [vmem:[%s1 + $0x870] sm:$0xff]
        %v640 = vld [vmem:[%s1 + $0x878] sm:$0xff]
        %v641 = vld [vmem:[%s1 + $0x880] sm:$0xff]
        %v642 = vld [vmem:[%s1 + $0x888] sm:$0xff]
        %v643 = vld [vmem:[%s1 + $0x890] sm:$0xff]
        %v644 = vld [vmem:[%s1 + $0x898] sm:$0xff]
        %v645 = vld [vmem:[%s1 + $0x8a0] sm:$0xff]
        %v646 = vld [vmem:[%s1 + $0x8a8] sm:$0xff]
        %v647 = vld [vmem:[%s1 + $0x8b0] sm:$0xff]
        %v648 = vld [vmem:[%s1 + $0x8b8] sm:$0xff]
        %v649 = vld [vmem:[%s1 + $0x8c0] sm:$0xff]
        %v650 = vld [vmem:[%s1 + $0x8c8] sm:$0xff]
        %v651 = vld [vmem:[%s1 + $0x8d0] sm:$0xff]
        %v652 = vld [vmem:[%s1 + $0x8d8] sm:$0xff]
        %v653 = vld [vmem:[%s1 + $0x8e0] sm:$0xff]
        %v654 = vld [vmem:[%s1 + $0x8e8] sm:$0xff]
        %v655 = vld [vmem:[%s1 + $0x8f0] sm:$0xff]
        %v656 = vld [vmem:[%s1 + $0x8f8] sm:$0xff]
        %v657 = vld [vmem:[%s1 + $0x900] sm:$0xff]
        %v658 = vld [vmem:[%s1 + $0x908] sm:$0xff]
        %v659 = vld [vmem:[%s1 + $0x910] sm:$0xff]
        %v660 = vld [vmem:[%s1 + $0x918] sm:$0xff]
        %v661 = vld [vmem:[%s1 + $0x920] sm:$0xff]
        %v662 = vld [vmem:[%s1 + $0x928] sm:$0xff]
        %v663 = vld [vmem:[%s1 + $0x930] sm:$0xff]
        %v664 = vld [vmem:[%s1 + $0x938] sm:$0xff]
        %v665 = vld [vmem:[%s1 + $0x940] sm:$0xff]
        %v666 = vld [vmem:[%s1 + $0x948] sm:$0xff]
        %v667 = vld [vmem:[%s1 + $0x950] sm:$0xff]
        %v668 = vld [vmem:[%s1 + $0x958] sm:$0xff]
        %v669 = vld [vmem:[%s1 + $0x960] sm:$0xff]
        %v670 = vld [vmem:[%s1 + $0x968] sm:$0xff]
        %v671 = vld [vmem:[%s1 + $0x970] sm:$0xff]
        %v672 = vld [vmem:[%s1 + $0x978] sm:$0xff]
        %v673 = vld [vmem:[%s1 + $0x980] sm:$0xff]
        %v674 = vld [vmem:[%s1 + $0x988] sm:$0xff]
        %v675 = vld [vmem:[%s1 + $0x990] sm:$0xff]
        %v676 = vld [vmem:[%s1 + $0x998] sm:$0xff]
        %v677 = vld [vmem:[%s1 + $0x9a0] sm:$0xff]
        %v678 = vld [vmem:[%s1 + $0x9a8] sm:$0xff]
        %v679 = vld [vmem:[%s1 + $0x9b0] sm:$0xff]
        %v680 = vld [vmem:[%s1 + $0x9b8] sm:$0xff]
        %v681 = vld [vmem:[%s1 + $0x9c0] sm:$0xff]
        %v682 = vld [vmem:[%s1 + $0x9c8] sm:$0xff]
        %v683 = vld [vmem:[%s1 + $0x9d0] sm:$0xff]
        %v684 = vld [vmem:[%s1 + $0x9d8] sm:$0xff]
        %v685 = vld [vmem:[%s1 + $0x9e0] sm:$0xff]
        %v686 = vld [vmem:[%s1 + $0x9e8] sm:$0xff]
        %v687 = vld [vmem:[%s1 + $0x9f0] sm:$0xff]
        %v688 = vld [vmem:[%s1 + $0x9f8] sm:$0xff]
        %v689 = vld [vmem:[%s1 + $0xa00] sm:$0xff]
        %v690 = vld [vmem:[%s1 + $0xa08] sm:$0xff]
        %v691 = vld [vmem:[%s1 + $0xa10] sm:$0xff]
        %v692 = vld [vmem:[%s1 + $0xa18] sm:$0xff]
        %v693 = vld [vmem:[%s1 + $0xa20] sm:$0xff]
        %v694 = vld [vmem:[%s1 + $0xa28] sm:$0xff]
        %v695 = vld [vmem:[%s1 + $0xa30] sm:$0xff]
        %v696 = vld [vmem:[%s1 + $0xa38] sm:$0xff]
        %v697 = vld [vmem:[%s1 + $0xa40] sm:$0xff]
        %v698 = vld [vmem:[%s1 + $0xa48] sm:$0xff]
        %v699 = vld [vmem:[%s1 + $0xa50] sm:$0xff]
        %v700 = vld [vmem:[%s1 + $0xa58] sm:$0xff]
        %v701 = vld [vmem:[%s1 + $0xa60] sm:$0xff]
        %v702 = vld [vmem:[%s1 + $0xa68] sm:$0xff]
        %v703 = vld [vmem:[%s1 + $0xa70] sm:$0xff]
        %v704 = vld [vmem:[%s1 + $0xa78] sm:$0xff]
        %v705 = vld [vmem:[%s1 + $0xa80] sm:$0xff]
        %v706 = vld [vmem:[%s1 + $0xa88] sm:$0xff]
        %v707 = vld [vmem:[%s1 + $0xa90] sm:$0xff]
        %v708 = vld [vmem:[%s1 + $0xa98] sm:$0xff]
        %v709 = vld [vmem:[%s1 + $0xaa0] sm:$0xff]
        %v710 = vld [vmem:[%s1 + $0xaa8] sm:$0xff]
        %v711 = vld [vmem:[%s1 + $0xab0] sm:$0xff]
        %v712 = vld [vmem:[%s1 + $0xab8] sm:$0xff]
        %v713 = vld [vmem:[%s1 + $0xac0] sm:$0xff]
        %v714 = vld [vmem:[%s1 + $0xac8] sm:$0xff]
        %v715 = vld [vmem:[%s1 + $0xad0] sm:$0xff]
        %v716 = vld [vmem:[%s1 + $0xad8] sm:$0xff]
        %v717 = vld [vmem:[%s1 + $0xae0] sm:$0xff]
        %v718 = vld [vmem:[%s1 + $0xae8] sm:$0xff]
        %v719 = vld [vmem:[%s1 + $0xaf0] sm:$0xff]
        %v720 = vld [vmem:[%s1 + $0xaf8] sm:$0xff]
        %v721 = vld [vmem:[%s1 + $0xb00] sm:$0xff]
        %v722 = vld [vmem:[%s1 + $0xb08] sm:$0xff]
        %v723 = vld [vmem:[%s1 + $0xb10] sm:$0xff]
        %v724 = vld [vmem:[%s1 + $0xb18] sm:$0xff]
        %v725 = vld [vmem:[%s1 + $0xb20] sm:$0xff]
        %v726 = vld [vmem:[%s1 + $0xb28] sm:$0xff]
        %v727 = vld [vmem:[%s1 + $0xb30] sm:$0xff]
        %v728 = vld [vmem:[%s1 + $0xb38] sm:$0xff]
        %v729 = vld [vmem:[%s1 + $0xb40] sm:$0xff]
        %v730 = vld [vmem:[%s1 + $0xb48] sm:$0xff]
        %v731 = vld [vmem:[%s1 + $0xb50] sm:$0xff]
        %v732 = vld [vmem:[%s1 + $0xb58] sm:$0xff]
        %v733 = vld [vmem:[%s1 + $0xb60] sm:$0xff]
        %v734 = vld [vmem:[%s1 + $0xb68] sm:$0xff]
        %v735 = vld [vmem:[%s1 + $0xb70] sm:$0xff]
        %v736 = vld [vmem:[%s1 + $0xb78] sm:$0xff]
        %v737 = vld [vmem:[%s1 + $0xb80] sm:$0xff]
        %v738 = vld [vmem:[%s1 + $0xb88] sm:$0xff]
        %v739 = vld [vmem:[%s1 + $0xb90] sm:$0xff]
        %v740 = vld [vmem:[%s1 + $0xb98] sm:$0xff]
        %v741 = vld [vmem:[%s1 + $0xba0] sm:$0xff]
        %v742 = vld [vmem:[%s1 + $0xba8] sm:$0xff]
        %v743 = vld [vmem:[%s1 + $0xbb0] sm:$0xff]
        %v744 = vld [vmem:[%s1 + $0xbb8] sm:$0xff]
        %v745 = vld [vmem:[%s1 + $0xbc0] sm:$0xff]
        %v746 = vld [vmem:[%s1 + $0xbc8] sm:$0xff]
        %v747 = vld [vmem:[%s1 + $0xbd0] sm:$0xff]
        %v748 = vld [vmem:[%s1 + $0xbd8] sm:$0xff]
        %v749 = vld [vmem:[%s1 + $0xbe0] sm:$0xff]
        %v750 = vld [vmem:[%s1 + $0xbe8] sm:$0xff]
        %v751 = vld [vmem:[%s1 + $0xbf0] sm:$0xff]
        %v752 = vld [vmem:[%s1 + $0xbf8] sm:$0xff]
        %v753 = vld [vmem:[%s1 + $0xc00] sm:$0xff]
        %v754 = vld [vmem:[%s1 + $0xc08] sm:$0xff]
        %v755 = vld [vmem:[%s1 + $0xc10] sm:$0xff]
        %v756 = vld [vmem:[%s1 + $0xc18] sm:$0xff]
        %v757 = vld [vmem:[%s1 + $0xc20] sm:$0xff]
        %v758 = vld [vmem:[%s1 + $0xc28] sm:$0xff]
        %v759 = vld [vmem:[%s1 + $0xc30] sm:$0xff]
        %v760 = vld [vmem:[%s1 + $0xc38] sm:$0xff]
        %v761 = vld [vmem:[%s1 + $0xc40] sm:$0xff]
        %v762 = vld [vmem:[%s1 + $0xc48] sm:$0xff]
        %v763 = vld [vmem:[%s1 + $0xc50] sm:$0xff]
        %v764 = vld [vmem:[%s1 + $0xc58] sm:$0xff]
        %v765 = vld [vmem:[%s1 + $0xc60] sm:$0xff]
        %v766 = vld [vmem:[%s1 + $0xc68] sm:$0xff]
        %v767 = vld [vmem:[%s1 + $0xc70] sm:$0xff]
        %v768 = vld [vmem:[%s1 + $0xc78] sm:$0xff]
        %v769 = vld [vmem:[%s1 + $0xc80] sm:$0xff]
        %v770 = vld [vmem:[%s1 + $0xc88] sm:$0xff]
        %v771 = vld [vmem:[%s1 + $0xc90] sm:$0xff]
        %v772 = vld [vmem:[%s1 + $0xc98] sm:$0xff]
        %v773 = vld [vmem:[%s1 + $0xca0] sm:$0xff]
        %v774 = vld [vmem:[%s1 + $0xca8] sm:$0xff]
        %v775 = vld [vmem:[%s1 + $0xcb0] sm:$0xff]
        %v776 = vld [vmem:[%s1 + $0xcb8] sm:$0xff]
        %v777 = vld [vmem:[%s1 + $0xcc0] sm:$0xff]
        %v778 = vld [vmem:[%s1 + $0xcc8] sm:$0xff]
        %v779 = vld [vmem:[%s1 + $0xcd0] sm:$0xff]
        %v780 = vld [vmem:[%s1 + $0xcd8] sm:$0xff]
        %v781 = vld [vmem:[%s1 + $0xce0] sm:$0xff]
        %v782 = vld [vmem:[%s1 + $0xce8] sm:$0xff]
        %v783 = vld [vmem:[%s1 + $0xcf0] sm:$0xff]
        %v784 = vld [vmem:[%s1 + $0xcf8] sm:$0xff]
        %v785 = vld [vmem:[%s1 + $0xd00] sm:$0xff]
        %v786 = vld [vmem:[%s1 + $0xd08] sm:$0xff]
        %v787 = vld [vmem:[%s1 + $0xd10] sm:$0xff]
        %v788 = vld [vmem:[%s1 + $0xd18] sm:$0xff]
        %v789 = vld [vmem:[%s1 + $0xd20] sm:$0xff]
        %v790 = vld [vmem:[%s1 + $0xd28] sm:$0xff]
        %v791 = vld [vmem:[%s1 + $0xd30] sm:$0xff]
        %v792 = vld [vmem:[%s1 + $0xd38] sm:$0xff]
        %v793 = vld [vmem:[%s1 + $0xd40] sm:$0xff]
        %v794 = vld [vmem:[%s1 + $0xd48] sm:$0xff]
        %v795 = vld [vmem:[%s1 + $0xd50] sm:$0xff]
        %v796 = vld [vmem:[%s1 + $0xd58] sm:$0xff]
        %v797 = vld [vmem:[%s1 + $0xd60] sm:$0xff]
        %v798 = vld [vmem:[%s1 + $0xd68] sm:$0xff]
        %v799 = vld [vmem:[%s1 + $0xd70] sm:$0xff]
        %v800 = vld [vmem:[%s1 + $0xd78] sm:$0xff]
        %v801 = vld [vmem:[%s1 + $0xd80] sm:$0xff]
        %v802 = vld [vmem:[%s1 + $0xd88] sm:$0xff]
        %v803 = vld [vmem:[%s1 + $0xd90] sm:$0xff]
        %v804 = vld [vmem:[%s1 + $0xd98] sm:$0xff]
        %v805 = vld [vmem:[%s1 + $0xda0] sm:$0xff]
        %v806 = vld [vmem:[%s1 + $0xda8] sm:$0xff]
        %v807 = vld [vmem:[%s1 + $0xdb0] sm:$0xff]
        %v808 = vld [vmem:[%s1 + $0xdb8] sm:$0xff]
        %v809 = vld [vmem:[%s1 + $0xdc0] sm:$0xff]
        %v810 = vld [vmem:[%s1 + $0xdc8] sm:$0xff]
        %v811 = vld [vmem:[%s1 + $0xdd0] sm:$0xff]
        %v812 = vld [vmem:[%s1 + $0xdd8] sm:$0xff]
        %v813 = vld [vmem:[%s1 + $0xde0] sm:$0xff]
        %v814 = vld [vmem:[%s1 + $0xde8] sm:$0xff]
        %v815 = vld [vmem:[%s1 + $0xdf0] sm:$0xff]
        %v816 = vld [vmem:[%s1 + $0xdf8] sm:$0xff]
        %v817 = vld [vmem:[%s1 + $0xe00] sm:$0xff]
        %v818 = vld [vmem:[%s1 + $0xe08] sm:$0xff]
        %v819 = vld [vmem:[%s1 + $0xe10] sm:$0xff]
        %v820 = vld [vmem:[%s1 + $0xe18] sm:$0xff]
        %v821 = vld [vmem:[%s1 + $0xe20] sm:$0xff]
        %v822 = vld [vmem:[%s1 + $0xe28] sm:$0xff]
        %v823 = vld [vmem:[%s1 + $0xe30] sm:$0xff]
        %v824 = vld [vmem:[%s1 + $0xe38] sm:$0xff]
        %v825 = vld [vmem:[%s1 + $0xe40] sm:$0xff]
        %v826 = vld [vmem:[%s1 + $0xe48] sm:$0xff]
        %v827 = vld [vmem:[%s1 + $0xe50] sm:$0xff]
        %v828 = vld [vmem:[%s1 + $0xe58] sm:$0xff]
        %v829 = vld [vmem:[%s1 + $0xe60] sm:$0xff]
        %v830 = vld [vmem:[%s1 + $0xe68] sm:$0xff]
        %v831 = vld [vmem:[%s1 + $0xe70] sm:$0xff]
        %v832 = vld [vmem:[%s1 + $0xe78] sm:$0xff]
        %v833 = vld [vmem:[%s1 + $0xe80] sm:$0xff]
        %v834 = vld [vmem:[%s1 + $0xe88] sm:$0xff]
        %v835 = vld [vmem:[%s1 + $0xe90] sm:$0xff]
        %v836 = vld [vmem:[%s1 + $0xe98] sm:$0xff]
        %v837 = vld [vmem:[%s1 + $0xea0] sm:$0xff]
        %v838 = vld [vmem:[%s1 + $0xea8] sm:$0xff]
        %v839 = vld [vmem:[%s1 + $0xeb0] sm:$0xff]
        %v840 = vld [vmem:[%s1 + $0xeb8] sm:$0xff]
        %v841 = vld [vmem:[%s1 + $0xec0] sm:$0xff]
        %v842 = vld [vmem:[%s1 + $0xec8] sm:$0xff]
        %v843 = vld [vmem:[%s1 + $0xed0] sm:$0xff]
        %v844 = vld [vmem:[%s1 + $0xed8] sm:$0xff]
        %v845 = vld [vmem:[%s1 + $0xee0] sm:$0xff]
        %v846 = vld [vmem:[%s1 + $0xee8] sm:$0xff]
        %v847 = vld [vmem:[%s1 + $0xef0] sm:$0xff]
        %v848 = vld [vmem:[%s1 + $0xef8] sm:$0xff]
        %v849 = vld [vmem:[%s1 + $0xf00] sm:$0xff]
        %v850 = vld [vmem:[%s1 + $0xf08] sm:$0xff]
        %v851 = vld [vmem:[%s1 + $0xf10] sm:$0xff]
        %v852 = vld [vmem:[%s1 + $0xf18] sm:$0xff]
        %v853 = vld [vmem:[%s1 + $0xf20] sm:$0xff]
        %v854 = vld [vmem:[%s1 + $0xf28] sm:$0xff]
        %v855 = vld [vmem:[%s1 + $0xf30] sm:$0xff]
        %v856 = vld [vmem:[%s1 + $0xf38] sm:$0xff]
        %v857 = vld [vmem:[%s1 + $0xf40] sm:$0xff]
        %v858 = vld [vmem:[%s1 + $0xf48] sm:$0xff]
        %v859 = vld [vmem:[%s1 + $0xf50] sm:$0xff]
        %v860 = vld [vmem:[%s1 + $0xf58] sm:$0xff]
        %v861 = vld [vmem:[%s1 + $0xf60] sm:$0xff]
        %v862 = vld [vmem:[%s1 + $0xf68] sm:$0xff]
        %v863 = vld [vmem:[%s1 + $0xf70] sm:$0xff]
        %v864 = vld [vmem:[%s1 + $0xf78] sm:$0xff]
        %v865 = vld [vmem:[%s1 + $0xf80] sm:$0xff]
        %v866 = vld [vmem:[%s1 + $0xf88] sm:$0xff]
        %v867 = vld [vmem:[%s1 + $0xf90] sm:$0xff]
        %v868 = vld [vmem:[%s1 + $0xf98] sm:$0xff]
        %v869 = vld [vmem:[%s1 + $0xfa0] sm:$0xff]
        %v870 = vld [vmem:[%s1 + $0xfa8] sm:$0xff]
        %v871 = vld [vmem:[%s1 + $0xfb0] sm:$0xff]
        %v872 = vld [vmem:[%s1 + $0xfb8] sm:$0xff]
        %v873 = vld [vmem:[%s1 + $0xfc0] sm:$0xff]
        %v874 = vld [vmem:[%s1 + $0xfc8] sm:$0xff]
        %v875 = vld [vmem:[%s1 + $0xfd0] sm:$0xff]
        %v876 = vld [vmem:[%s1 + $0xfd8] sm:$0xff]
        %v877 = vld [vmem:[%s1 + $0xfe0] sm:$0xff]
        %v878 = vld [vmem:[%s1 + $0xfe8] sm:$0xff]
        %v879 = vld [vmem:[%s1 + $0xff0] sm:$0xff]
        %v880 = vld [vmem:[%s1 + $0xff8] sm:$0xff]
        %v881 = vld [vmem:[%s1 + $0x1000] sm:$0xff]
        %v882 = vld [vmem:[%s1 + $0x1008] sm:$0xff]
        %v883 = vld [vmem:[%s1 + $0x1010] sm:$0xff]
        %v884 = vld [vmem:[%s1 + $0x1018] sm:$0xff]
        %v885 = vld [vmem:[%s1 + $0x1020] sm:$0xff]
        %v886 = vld [vmem:[%s1 + $0x1028] sm:$0xff]
        %v887 = vld [vmem:[%s1 + $0x1030] sm:$0xff]
        %v888 = vld [vmem:[%s1 + $0x1038] sm:$0xff]
        %v889 = vld [vmem:[%s1 + $0x1040] sm:$0xff]
        %v890 = vld [vmem:[%s1 + $0x1048] sm:$0xff]
        %v891 = vld [vmem:[%s1 + $0x1050] sm:$0xff]
        %v892 = vld [vmem:[%s1 + $0x1058] sm:$0xff]
        %v893 = vld [vmem:[%s1 + $0x1060] sm:$0xff]
        %v894 = vld [vmem:[%s1 + $0x1068] sm:$0xff]
        %v895 = vld [vmem:[%s1 + $0x1070] sm:$0xff]
        %v896 = vld [vmem:[%s1 + $0x1078] sm:$0xff]
        %v897 = vld [vmem:[%s1 + $0x1080] sm:$0xff]
        %v898 = vld [vmem:[%s1 + $0x1088] sm:$0xff]
        %v899 = vld [vmem:[%s1 + $0x1090] sm:$0xff]
        %v900 = vld [vmem:[%s1 + $0x1098] sm:$0xff]
        %v901 = vld [vmem:[%s1 + $0x10a0] sm:$0xff]
        %v902 = vld [vmem:[%s1 + $0x10a8] sm:$0xff]
        %v903 = vld [vmem:[%s1 + $0x10b0] sm:$0xff]
        %v904 = vld [vmem:[%s1 + $0x10b8] sm:$0xff]
        %v905 = vld [vmem:[%s1 + $0x10c0] sm:$0xff]
        %v906 = vld [vmem:[%s1 + $0x10c8] sm:$0xff]
        %v907 = vld [vmem:[%s1 + $0x10d0] sm:$0xff]
        %v908 = vld [vmem:[%s1 + $0x10d8] sm:$0xff]
        %v909 = vld [vmem:[%s1 + $0x10e0] sm:$0xff]
        %v910 = vld [vmem:[%s1 + $0x10e8] sm:$0xff]
        %v911 = vld [vmem:[%s1 + $0x10f0] sm:$0xff]
        %v912 = vld [vmem:[%s1 + $0x10f8] sm:$0xff]
        %v913 = vld [vmem:[%s1 + $0x1100] sm:$0xff]
        %v914 = vld [vmem:[%s1 + $0x1108] sm:$0xff]
        %v915 = vld [vmem:[%s1 + $0x1110] sm:$0xff]
        %v916 = vld [vmem:[%s1 + $0x1118] sm:$0xff]
        %v917 = vld [vmem:[%s1 + $0x1120] sm:$0xff]
        %v918 = vld [vmem:[%s1 + $0x1128] sm:$0xff]
        %v919 = vld [vmem:[%s1 + $0x1130] sm:$0xff]
        %v920 = vld [vmem:[%s1 + $0x1138] sm:$0xff]
        %v921 = vld [vmem:[%s1 + $0x1140] sm:$0xff]
        %v922 = vld [vmem:[%s1 + $0x1148] sm:$0xff]
        %v923 = vld [vmem:[%s1 + $0x1150] sm:$0xff]
        %v924 = vld [vmem:[%s1 + $0x1158] sm:$0xff]
        %v925 = vld [vmem:[%s1 + $0x1160] sm:$0xff]
        %v926 = vld [vmem:[%s1 + $0x1168] sm:$0xff]
        %v927 = vld [vmem:[%s1 + $0x1170] sm:$0xff]
        %v928 = vld [vmem:[%s1 + $0x1178] sm:$0xff]
        %v929 = vld [vmem:[%s1 + $0x1180] sm:$0xff]
        %v930 = vld [vmem:[%s1 + $0x1188] sm:$0xff]
        %v931 = vld [vmem:[%s1 + $0x1190] sm:$0xff]
        %v932 = vld [vmem:[%s1 + $0x1198] sm:$0xff]
        %v933 = vld [vmem:[%s1 + $0x11a0] sm:$0xff]
        %v934 = vld [vmem:[%s1 + $0x11a8] sm:$0xff]
        %v935 = vld [vmem:[%s1 + $0x11b0] sm:$0xff]
        %v936 = vld [vmem:[%s1 + $0x11b8] sm:$0xff]
        %v937 = vld [vmem:[%s1 + $0x11c0] sm:$0xff]
        %v938 = vld [vmem:[%s1 + $0x11c8] sm:$0xff]
        %v939 = vld [vmem:[%s1 + $0x11d0] sm:$0xff]
        %v940 = vld [vmem:[%s1 + $0x11d8] sm:$0xff]
        %v941 = vld [vmem:[%s1 + $0x11e0] sm:$0xff]
        %v942 = vld [vmem:[%s1 + $0x11e8] sm:$0xff]
        %v943 = vld [vmem:[%s1 + $0x11f0] sm:$0xff]
        %v944 = vld [vmem:[%s1 + $0x11f8] sm:$0xff]
        %v945 = vld [vmem:[%s2] sm:$0x7]
        %v947 = vlaneseq
        %v948 = vshrl.u32 %v947, 7
        %v949 = vsub.s32 0, %v948
        %v950 = vrot.slane %v945, %v949
        %v951 = vlaneseq
        %v952 = vshrl.u32 %v951, 7
        %v953 = vsub.s32 1, %v952
        %v954 = vrot.slane %v945, %v953
        %v955 = vlaneseq
        %v956 = vshrl.u32 %v955, 7
        %v957 = vsub.s32 2, %v956
        %v958 = vrot.slane %v945, %v957
        %962 = vmatprep.subr.mxu0 %v415
        %963 = vmatpush1.msra.mxu0 %v414
        %964 = vmatprep.subr.mxu0 %v412
        %965 = vmatpush1.msra.mxu0 %v411
        %966 = vmatprep.subr.mxu0 %v409
        %967 = vmatpush1.msra.mxu0 %v408
        %968 = vmatprep.subr.mxu0 %v406
        %969 = vmatpush1.msra.mxu0 %v405
        %970 = vmatprep.subr.mxu0 %v403
        %971 = vmatpush1.msra.mxu0 %v402
        %972 = vmatprep.subr.mxu0 %v400
        %973 = vmatpush1.msra.mxu0 %v399
        %974 = vmatprep.subr.mxu0 %v397
        %975 = vmatpush1.msra.mxu0 %v396
        %976 = vmatprep.subr.mxu0 %v394
        %977 = vmatpush1.msra.mxu0 %v393
        %978 = vmatprep.subr.mxu0 %v391
        %979 = vmatpush1.msra.mxu0 %v390
        %980 = vmatprep.subr.mxu0 %v388
        %981 = vmatpush1.msra.mxu0 %v387
        %982 = vmatprep.subr.mxu0 %v385
        %983 = vmatpush1.msra.mxu0 %v384
        %984 = vmatprep.subr.mxu0 %v382
        %985 = vmatpush1.msra.mxu0 %v381
        %986 = vmatprep.subr.mxu0 %v379
        %987 = vmatpush1.msra.mxu0 %v378
        %988 = vmatprep.subr.mxu0 %v376
        %989 = vmatpush1.msra.mxu0 %v375
        %990 = vmatprep.subr.mxu0 %v373
        %991 = vmatpush1.msra.mxu0 %v372
        %992 = vmatprep.subr.mxu0 %v370
        %993 = vmatpush1.msra.mxu0 %v369
        %994 = vmatprep.subr.mxu0 %v463
        %995 = vmatpush2.msra.mxu0 %v462
        %996 = vmatprep.subr.mxu0 %v460
        %997 = vmatpush2.msra.mxu0 %v459
        %998 = vmatprep.subr.mxu0 %v457
        %999 = vmatpush2.msra.mxu0 %v456
        %1000 = vmatprep.subr.mxu0 %v454
        %1001 = vmatpush2.msra.mxu0 %v453
        %1002 = vmatprep.subr.mxu0 %v451
        %1003 = vmatpush2.msra.mxu0 %v450
        %1004 = vmatprep.subr.mxu0 %v448
        %1005 = vmatpush2.msra.mxu0 %v447
        %1006 = vmatprep.subr.mxu0 %v445
        %1007 = vmatpush2.msra.mxu0 %v444
        %1008 = vmatprep.subr.mxu0 %v442
        %1009 = vmatpush2.msra.mxu0 %v441
        %1010 = vmatprep.subr.mxu0 %v439
        %1011 = vmatpush2.msra.mxu0 %v438
        %1012 = vmatprep.subr.mxu0 %v436
        %1013 = vmatpush2.msra.mxu0 %v435
        %1014 = vmatprep.subr.mxu0 %v433
        %1015 = vmatpush2.msra.mxu0 %v432
        %1016 = vmatprep.subr.mxu0 %v430
        %1017 = vmatpush2.msra.mxu0 %v429
        %1018 = vmatprep.subr.mxu0 %v427
        %1019 = vmatpush2.msra.mxu0 %v426
        %1020 = vmatprep.subr.mxu0 %v424
        %1021 = vmatpush2.msra.mxu0 %v423
        %1022 = vmatprep.subr.mxu0 %v421
        %1023 = vmatpush2.msra.mxu0 %v420
        %1024 = vmatprep.subr.mxu0 %v418
        %1025 = vmatpush2.msra.mxu0 %v417
        %1026 = vmatprep.mubr.f32.mxu0 %v202
        %1027 = vmatmul.mubr.f32.gmra.mxu0 %v201
        %v1028 = vpop.f32.mrf.mxu0
        %v1029 = vadd.f32 %v950, %v1028
        %v1030 = vpop.f32.mrf.mxu0
        %v1031 = vadd.f32 %v954, %v1030
        %1032 = vmatprep.mubr.f32.mxu0 %v214
        %1033 = vmatmul.mubr.f32.gmra.mxu0 %v213
        %v1034 = vpop.f32.mrf.mxu0
        %v1035 = vadd.f32 %v950, %v1034
        %v1036 = vpop.f32.mrf.mxu0
        %v1037 = vadd.f32 %v954, %v1036
        %1038 = vmatprep.mubr.f32.mxu0 %v226
        %1039 = vmatmul.mubr.f32.gmra.mxu0 %v225
        %v1040 = vpop.f32.mrf.mxu0
        %v1041 = vadd.f32 %v950, %v1040
        %v1042 = vpop.f32.mrf.mxu0
        %v1043 = vadd.f32 %v954, %v1042
        %1044 = vmatprep.mubr.f32.mxu0 %v238
        %1045 = vmatmul.mubr.f32.gmra.mxu0 %v237
        %v1046 = vpop.f32.mrf.mxu0
        %v1047 = vadd.f32 %v950, %v1046
        %v1048 = vpop.f32.mrf.mxu0
        %v1049 = vadd.f32 %v954, %v1048
        %1050 = vmatprep.mubr.f32.mxu0 %v250
        %1051 = vmatmul.mubr.f32.gmra.mxu0 %v249
        %v1052 = vpop.f32.mrf.mxu0
        %v1053 = vadd.f32 %v950, %v1052
        %v1054 = vpop.f32.mrf.mxu0
        %v1055 = vadd.f32 %v954, %v1054
        %1056 = vmatprep.mubr.f32.mxu0 %v262
        %1057 = vmatmul.mubr.f32.gmra.mxu0 %v261
        %v1058 = vpop.f32.mrf.mxu0
        %v1059 = vadd.f32 %v950, %v1058
        %v1060 = vpop.f32.mrf.mxu0
        %v1061 = vadd.f32 %v954, %v1060
        %1062 = vmatprep.mubr.f32.mxu0 %v274
        %1063 = vmatmul.mubr.f32.gmra.mxu0 %v273
        %v1064 = vpop.f32.mrf.mxu0
        %v1065 = vadd.f32 %v950, %v1064
        %v1066 = vpop.f32.mrf.mxu0
        %v1067 = vadd.f32 %v954, %v1066
        %1068 = vmatprep.mubr.f32.mxu0 %v286
        %1069 = vmatmul.mubr.f32.gmra.mxu0 %v285
        %v1070 = vpop.f32.mrf.mxu0
        %v1071 = vadd.f32 %v950, %v1070
        %v1072 = vpop.f32.mrf.mxu0
        %v1073 = vadd.f32 %v954, %v1072
        %1074 = vmatprep.mubr.f32.mxu0 %v298
        %1075 = vmatmul.mubr.f32.gmra.mxu0 %v297
        %v1076 = vpop.f32.mrf.mxu0
        %v1077 = vadd.f32 %v950, %v1076
        %v1078 = vpop.f32.mrf.mxu0
        %v1079 = vadd.f32 %v954, %v1078
        %1080 = vmatprep.mubr.f32.mxu0 %v310
        %1081 = vmatmul.mubr.f32.gmra.mxu0 %v309
        %v1082 = vpop.f32.mrf.mxu0
        %v1083 = vadd.f32 %v950, %v1082
        %v1084 = vpop.f32.mrf.mxu0
        %v1085 = vadd.f32 %v954, %v1084
        %1086 = vmatprep.mubr.f32.mxu0 %v322
        %1087 = vmatmul.mubr.f32.gmra.mxu0 %v321
        %v1088 = vpop.f32.mrf.mxu0
        %v1089 = vadd.f32 %v950, %v1088
        %v1090 = vpop.f32.mrf.mxu0
        %v1091 = vadd.f32 %v954, %v1090
        %1092 = vmatprep.mubr.f32.mxu0 %v334
        %1093 = vmatmul.mubr.f32.gmra.mxu0 %v333
        %v1094 = vpop.f32.mrf.mxu0
        %v1095 = vadd.f32 %v950, %v1094
        %v1096 = vpop.f32.mrf.mxu0
        %v1097 = vadd.f32 %v954, %v1096
        %1098 = vmatprep.mubr.f32.mxu0 %v346
        %1099 = vmatmul.mubr.f32.gmra.mxu0 %v345
        %v1100 = vpop.f32.mrf.mxu0
        %v1101 = vadd.f32 %v950, %v1100
        %v1102 = vpop.f32.mrf.mxu0
        %v1103 = vadd.f32 %v954, %v1102
        %1104 = vmatprep.mubr.f32.mxu0 %v358
        %1105 = vmatmul.mubr.f32.gmra.mxu0 %v357
        %v1106 = vpop.f32.mrf.mxu0
        %v1107 = vadd.f32 %v950, %v1106
        %v1108 = vpop.f32.mrf.mxu0
        %v1109 = vadd.f32 %v954, %v1108
        %1110 = vdwg.mxu0
        %1111 = vmatprep.subr.mxu0 %v511
        %1112 = vmatpush1.msra.mxu0 %v510
        %1113 = vmatprep.subr.mxu0 %v508
        %1114 = vmatpush1.msra.mxu0 %v507
        %1115 = vmatprep.subr.mxu0 %v505
        %1116 = vmatpush1.msra.mxu0 %v504
        %1117 = vmatprep.subr.mxu0 %v502
        %1118 = vmatpush1.msra.mxu0 %v501
        %1119 = vmatprep.subr.mxu0 %v499
        %1120 = vmatpush1.msra.mxu0 %v498
        %1121 = vmatprep.subr.mxu0 %v496
        %1122 = vmatpush1.msra.mxu0 %v495
        %1123 = vmatprep.subr.mxu0 %v493
        %1124 = vmatpush1.msra.mxu0 %v492
        %1125 = vmatprep.subr.mxu0 %v490
        %1126 = vmatpush1.msra.mxu0 %v489
        %1127 = vmatprep.subr.mxu0 %v487
        %1128 = vmatpush1.msra.mxu0 %v486
        %1129 = vmatprep.subr.mxu0 %v484
        %1130 = vmatpush1.msra.mxu0 %v483
        %1131 = vmatprep.subr.mxu0 %v481
        %1132 = vmatpush1.msra.mxu0 %v480
        %1133 = vmatprep.subr.mxu0 %v478
        %1134 = vmatpush1.msra.mxu0 %v477
        %1135 = vmatprep.subr.mxu0 %v475
        %1136 = vmatpush1.msra.mxu0 %v474
        %1137 = vmatprep.subr.mxu0 %v472
        %1138 = vmatpush1.msra.mxu0 %v471
        %1139 = vmatprep.subr.mxu0 %v469
        %1140 = vmatpush1.msra.mxu0 %v468
        %1141 = vmatprep.subr.mxu0 %v466
        %1142 = vmatpush1.msra.mxu0 %v465
        %1143 = vmatprep.subr.mxu0 %v559
        %1144 = vmatpush2.msra.mxu0 %v558
        %1145 = vmatprep.subr.mxu0 %v556
        %1146 = vmatpush2.msra.mxu0 %v555
        %1147 = vmatprep.subr.mxu0 %v553
        %1148 = vmatpush2.msra.mxu0 %v552
        %1149 = vmatprep.subr.mxu0 %v550
        %1150 = vmatpush2.msra.mxu0 %v549
        %1151 = vmatprep.subr.mxu0 %v547
        %1152 = vmatpush2.msra.mxu0 %v546
        %1153 = vmatprep.subr.mxu0 %v544
        %1154 = vmatpush2.msra.mxu0 %v543
        %1155 = vmatprep.subr.mxu0 %v541
        %1156 = vmatpush2.msra.mxu0 %v540
        %1157 = vmatprep.subr.mxu0 %v538
        %1158 = vmatpush2.msra.mxu0 %v537
        %1159 = vmatprep.subr.mxu0 %v535
        %1160 = vmatpush2.msra.mxu0 %v534
        %1161 = vmatprep.subr.mxu0 %v532
        %1162 = vmatpush2.msra.mxu0 %v531
        %1163 = vmatprep.subr.mxu0 %v529
        %1164 = vmatpush2.msra.mxu0 %v528
        %1165 = vmatprep.subr.mxu0 %v526
        %1166 = vmatpush2.msra.mxu0 %v525
        %1167 = vmatprep.subr.mxu0 %v523
        %1168 = vmatpush2.msra.mxu0 %v522
        %1169 = vmatprep.subr.mxu0 %v520
        %1170 = vmatpush2.msra.mxu0 %v519
        %1171 = vmatprep.subr.mxu0 %v517
        %1172 = vmatpush2.msra.mxu0 %v516
        %1173 = vmatprep.subr.mxu0 %v514
        %1174 = vmatpush2.msra.mxu0 %v513
        %1175 = vmatprep.mubr.f32.mxu0 %v204
        %1176 = vmatmul.mubr.f32.gmra.mxu0 %v203
        %v1177 = vpop.f32.mrf.mxu0
        %v1178 = vadd.f32 %v1029, %v1177
        %v1179 = vpop.f32.mrf.mxu0
        %v1180 = vadd.f32 %v1031, %v1179
        %1181 = vmatprep.mubr.f32.mxu0 %v216
        %1182 = vmatmul.mubr.f32.gmra.mxu0 %v215
        %v1183 = vpop.f32.mrf.mxu0
        %v1184 = vadd.f32 %v1035, %v1183
        %v1185 = vpop.f32.mrf.mxu0
        %v1186 = vadd.f32 %v1037, %v1185
        %1187 = vmatprep.mubr.f32.mxu0 %v228
        %1188 = vmatmul.mubr.f32.gmra.mxu0 %v227
        %v1189 = vpop.f32.mrf.mxu0
        %v1190 = vadd.f32 %v1041, %v1189
        %v1191 = vpop.f32.mrf.mxu0
        %v1192 = vadd.f32 %v1043, %v1191
        %1193 = vmatprep.mubr.f32.mxu0 %v240
        %1194 = vmatmul.mubr.f32.gmra.mxu0 %v239
        %v1195 = vpop.f32.mrf.mxu0
        %v1196 = vadd.f32 %v1047, %v1195
        %v1197 = vpop.f32.mrf.mxu0
        %v1198 = vadd.f32 %v1049, %v1197
        %1199 = vmatprep.mubr.f32.mxu0 %v252
        %1200 = vmatmul.mubr.f32.gmra.mxu0 %v251
        %v1201 = vpop.f32.mrf.mxu0
        %v1202 = vadd.f32 %v1053, %v1201
        %v1203 = vpop.f32.mrf.mxu0
        %v1204 = vadd.f32 %v1055, %v1203
        %1205 = vmatprep.mubr.f32.mxu0 %v264
        %1206 = vmatmul.mubr.f32.gmra.mxu0 %v263
        %v1207 = vpop.f32.mrf.mxu0
        %v1208 = vadd.f32 %v1059, %v1207
        %v1209 = vpop.f32.mrf.mxu0
        %v1210 = vadd.f32 %v1061, %v1209
        %1211 = vmatprep.mubr.f32.mxu0 %v276
        %1212 = vmatmul.mubr.f32.gmra.mxu0 %v275
        %v1213 = vpop.f32.mrf.mxu0
        %v1214 = vadd.f32 %v1065, %v1213
        %v1215 = vpop.f32.mrf.mxu0
        %v1216 = vadd.f32 %v1067, %v1215
        %1217 = vmatprep.mubr.f32.mxu0 %v288
        %1218 = vmatmul.mubr.f32.gmra.mxu0 %v287
        %v1219 = vpop.f32.mrf.mxu0
        %v1220 = vadd.f32 %v1071, %v1219
        %v1221 = vpop.f32.mrf.mxu0
        %v1222 = vadd.f32 %v1073, %v1221
        %1223 = vmatprep.mubr.f32.mxu0 %v300
        %1224 = vmatmul.mubr.f32.gmra.mxu0 %v299
        %v1225 = vpop.f32.mrf.mxu0
        %v1226 = vadd.f32 %v1077, %v1225
        %v1227 = vpop.f32.mrf.mxu0
        %v1228 = vadd.f32 %v1079, %v1227
        %1229 = vmatprep.mubr.f32.mxu0 %v312
        %1230 = vmatmul.mubr.f32.gmra.mxu0 %v311
        %v1231 = vpop.f32.mrf.mxu0
        %v1232 = vadd.f32 %v1083, %v1231
        %v1233 = vpop.f32.mrf.mxu0
        %v1234 = vadd.f32 %v1085, %v1233
        %1235 = vmatprep.mubr.f32.mxu0 %v324
        %1236 = vmatmul.mubr.f32.gmra.mxu0 %v323
        %v1237 = vpop.f32.mrf.mxu0
        %v1238 = vadd.f32 %v1089, %v1237
        %v1239 = vpop.f32.mrf.mxu0
        %v1240 = vadd.f32 %v1091, %v1239
        %1241 = vmatprep.mubr.f32.mxu0 %v336
        %1242 = vmatmul.mubr.f32.gmra.mxu0 %v335
        %v1243 = vpop.f32.mrf.mxu0
        %v1244 = vadd.f32 %v1095, %v1243
        %v1245 = vpop.f32.mrf.mxu0
        %v1246 = vadd.f32 %v1097, %v1245
        %1247 = vmatprep.mubr.f32.mxu0 %v348
        %1248 = vmatmul.mubr.f32.gmra.mxu0 %v347
        %v1249 = vpop.f32.mrf.mxu0
        %v1250 = vadd.f32 %v1101, %v1249
        %v1251 = vpop.f32.mrf.mxu0
        %v1252 = vadd.f32 %v1103, %v1251
        %1253 = vmatprep.mubr.f32.mxu0 %v360
        %1254 = vmatmul.mubr.f32.gmra.mxu0 %v359
        %v1255 = vpop.f32.mrf.mxu0
        %v1256 = vadd.f32 %v1107, %v1255
        %v1257 = vpop.f32.mrf.mxu0
        %v1258 = vadd.f32 %v1109, %v1257
        %1259 = vdwg.mxu0
        %1260 = vmatprep.subr.mxu0 %v607
        %1261 = vmatpush1.msra.mxu0 %v606
        %1262 = vmatprep.subr.mxu0 %v604
        %1263 = vmatpush1.msra.mxu0 %v603
        %1264 = vmatprep.subr.mxu0 %v601
        %1265 = vmatpush1.msra.mxu0 %v600
        %1266 = vmatprep.subr.mxu0 %v598
        %1267 = vmatpush1.msra.mxu0 %v597
        %1268 = vmatprep.subr.mxu0 %v595
        %1269 = vmatpush1.msra.mxu0 %v594
        %1270 = vmatprep.subr.mxu0 %v592
        %1271 = vmatpush1.msra.mxu0 %v591
        %1272 = vmatprep.subr.mxu0 %v589
        %1273 = vmatpush1.msra.mxu0 %v588
        %1274 = vmatprep.subr.mxu0 %v586
        %1275 = vmatpush1.msra.mxu0 %v585
        %1276 = vmatprep.subr.mxu0 %v583
        %1277 = vmatpush1.msra.mxu0 %v582
        %1278 = vmatprep.subr.mxu0 %v580
        %1279 = vmatpush1.msra.mxu0 %v579
        %1280 = vmatprep.subr.mxu0 %v577
        %1281 = vmatpush1.msra.mxu0 %v576
        %1282 = vmatprep.subr.mxu0 %v574
        %1283 = vmatpush1.msra.mxu0 %v573
        %1284 = vmatprep.subr.mxu0 %v571
        %1285 = vmatpush1.msra.mxu0 %v570
        %1286 = vmatprep.subr.mxu0 %v568
        %1287 = vmatpush1.msra.mxu0 %v567
        %1288 = vmatprep.subr.mxu0 %v565
        %1289 = vmatpush1.msra.mxu0 %v564
        %1290 = vmatprep.subr.mxu0 %v562
        %1291 = vmatpush1.msra.mxu0 %v561
        %1292 = vmatprep.subr.mxu0 %v655
        %1293 = vmatpush2.msra.mxu0 %v654
        %1294 = vmatprep.subr.mxu0 %v652
        %1295 = vmatpush2.msra.mxu0 %v651
        %1296 = vmatprep.subr.mxu0 %v649
        %1297 = vmatpush2.msra.mxu0 %v648
        %1298 = vmatprep.subr.mxu0 %v646
        %1299 = vmatpush2.msra.mxu0 %v645
        %1300 = vmatprep.subr.mxu0 %v643
        %1301 = vmatpush2.msra.mxu0 %v642
        %1302 = vmatprep.subr.mxu0 %v640
        %1303 = vmatpush2.msra.mxu0 %v639
        %1304 = vmatprep.subr.mxu0 %v637
        %1305 = vmatpush2.msra.mxu0 %v636
        %1306 = vmatprep.subr.mxu0 %v634
        %1307 = vmatpush2.msra.mxu0 %v633
        %1308 = vmatprep.subr.mxu0 %v631
        %1309 = vmatpush2.msra.mxu0 %v630
        %1310 = vmatprep.subr.mxu0 %v628
        %1311 = vmatpush2.msra.mxu0 %v627
        %1312 = vmatprep.subr.mxu0 %v625
        %1313 = vmatpush2.msra.mxu0 %v624
        %1314 = vmatprep.subr.mxu0 %v622
        %1315 = vmatpush2.msra.mxu0 %v621
        %1316 = vmatprep.subr.mxu0 %v619
        %1317 = vmatpush2.msra.mxu0 %v618
        %1318 = vmatprep.subr.mxu0 %v616
        %1319 = vmatpush2.msra.mxu0 %v615
        %1320 = vmatprep.subr.mxu0 %v613
        %1321 = vmatpush2.msra.mxu0 %v612
        %1322 = vmatprep.subr.mxu0 %v610
        %1323 = vmatpush2.msra.mxu0 %v609
        %1324 = vmatprep.mubr.f32.mxu0 %v206
        %1325 = vmatmul.mubr.f32.gmra.mxu0 %v205
        %v1326 = vpop.f32.mrf.mxu0
        %v1327 = vadd.f32 %v1178, %v1326
        %v1328 = vpop.f32.mrf.mxu0
        %v1329 = vadd.f32 %v1180, %v1328
        %1330 = vmatprep.mubr.f32.mxu0 %v218
        %1331 = vmatmul.mubr.f32.gmra.mxu0 %v217
        %v1332 = vpop.f32.mrf.mxu0
        %v1333 = vadd.f32 %v1184, %v1332
        %v1334 = vpop.f32.mrf.mxu0
        %v1335 = vadd.f32 %v1186, %v1334
        %1336 = vmatprep.mubr.f32.mxu0 %v230
        %1337 = vmatmul.mubr.f32.gmra.mxu0 %v229
        %v1338 = vpop.f32.mrf.mxu0
        %v1339 = vadd.f32 %v1190, %v1338
        %v1340 = vpop.f32.mrf.mxu0
        %v1341 = vadd.f32 %v1192, %v1340
        %1342 = vmatprep.mubr.f32.mxu0 %v242
        %1343 = vmatmul.mubr.f32.gmra.mxu0 %v241
        %v1344 = vpop.f32.mrf.mxu0
        %v1345 = vadd.f32 %v1196, %v1344
        %v1346 = vpop.f32.mrf.mxu0
        %v1347 = vadd.f32 %v1198, %v1346
        %1348 = vmatprep.mubr.f32.mxu0 %v254
        %1349 = vmatmul.mubr.f32.gmra.mxu0 %v253
        %v1350 = vpop.f32.mrf.mxu0
        %v1351 = vadd.f32 %v1202, %v1350
        %v1352 = vpop.f32.mrf.mxu0
        %v1353 = vadd.f32 %v1204, %v1352
        %1354 = vmatprep.mubr.f32.mxu0 %v266
        %1355 = vmatmul.mubr.f32.gmra.mxu0 %v265
        %v1356 = vpop.f32.mrf.mxu0
        %v1357 = vadd.f32 %v1208, %v1356
        %v1358 = vpop.f32.mrf.mxu0
        %v1359 = vadd.f32 %v1210, %v1358
        %1360 = vmatprep.mubr.f32.mxu0 %v278
        %1361 = vmatmul.mubr.f32.gmra.mxu0 %v277
        %v1362 = vpop.f32.mrf.mxu0
        %v1363 = vadd.f32 %v1214, %v1362
        %v1364 = vpop.f32.mrf.mxu0
        %v1365 = vadd.f32 %v1216, %v1364
        %1366 = vmatprep.mubr.f32.mxu0 %v290
        %1367 = vmatmul.mubr.f32.gmra.mxu0 %v289
        %v1368 = vpop.f32.mrf.mxu0
        %v1369 = vadd.f32 %v1220, %v1368
        %v1370 = vpop.f32.mrf.mxu0
        %v1371 = vadd.f32 %v1222, %v1370
        %1372 = vmatprep.mubr.f32.mxu0 %v302
        %1373 = vmatmul.mubr.f32.gmra.mxu0 %v301
        %v1374 = vpop.f32.mrf.mxu0
        %v1375 = vadd.f32 %v1226, %v1374
        %v1376 = vpop.f32.mrf.mxu0
        %v1377 = vadd.f32 %v1228, %v1376
        %1378 = vmatprep.mubr.f32.mxu0 %v314
        %1379 = vmatmul.mubr.f32.gmra.mxu0 %v313
        %v1380 = vpop.f32.mrf.mxu0
        %v1381 = vadd.f32 %v1232, %v1380
        %v1382 = vpop.f32.mrf.mxu0
        %v1383 = vadd.f32 %v1234, %v1382
        %1384 = vmatprep.mubr.f32.mxu0 %v326
        %1385 = vmatmul.mubr.f32.gmra.mxu0 %v325
        %v1386 = vpop.f32.mrf.mxu0
        %v1387 = vadd.f32 %v1238, %v1386
        %v1388 = vpop.f32.mrf.mxu0
        %v1389 = vadd.f32 %v1240, %v1388
        %1390 = vmatprep.mubr.f32.mxu0 %v338
        %1391 = vmatmul.mubr.f32.gmra.mxu0 %v337
        %v1392 = vpop.f32.mrf.mxu0
        %v1393 = vadd.f32 %v1244, %v1392
        %v1394 = vpop.f32.mrf.mxu0
        %v1395 = vadd.f32 %v1246, %v1394
        %1396 = vmatprep.mubr.f32.mxu0 %v350
        %1397 = vmatmul.mubr.f32.gmra.mxu0 %v349
        %v1398 = vpop.f32.mrf.mxu0
        %v1399 = vadd.f32 %v1250, %v1398
        %v1400 = vpop.f32.mrf.mxu0
        %v1401 = vadd.f32 %v1252, %v1400
        %1402 = vmatprep.mubr.f32.mxu0 %v362
        %1403 = vmatmul.mubr.f32.gmra.mxu0 %v361
        %v1404 = vpop.f32.mrf.mxu0
        %v1405 = vadd.f32 %v1256, %v1404
        %v1406 = vpop.f32.mrf.mxu0
        %v1407 = vadd.f32 %v1258, %v1406
        %1408 = vdwg.mxu0
        %1409 = vmatprep.subr.mxu0 %v703
        %1410 = vmatpush1.msra.mxu0 %v702
        %1411 = vmatprep.subr.mxu0 %v700
        %1412 = vmatpush1.msra.mxu0 %v699
        %1413 = vmatprep.subr.mxu0 %v697
        %1414 = vmatpush1.msra.mxu0 %v696
        %1415 = vmatprep.subr.mxu0 %v694
        %1416 = vmatpush1.msra.mxu0 %v693
        %1417 = vmatprep.subr.mxu0 %v691
        %1418 = vmatpush1.msra.mxu0 %v690
        %1419 = vmatprep.subr.mxu0 %v688
        %1420 = vmatpush1.msra.mxu0 %v687
        %1421 = vmatprep.subr.mxu0 %v685
        %1422 = vmatpush1.msra.mxu0 %v684
        %1423 = vmatprep.subr.mxu0 %v682
        %1424 = vmatpush1.msra.mxu0 %v681
        %1425 = vmatprep.subr.mxu0 %v679
        %1426 = vmatpush1.msra.mxu0 %v678
        %1427 = vmatprep.subr.mxu0 %v676
        %1428 = vmatpush1.msra.mxu0 %v675
        %1429 = vmatprep.subr.mxu0 %v673
        %1430 = vmatpush1.msra.mxu0 %v672
        %1431 = vmatprep.subr.mxu0 %v670
        %1432 = vmatpush1.msra.mxu0 %v669
        %1433 = vmatprep.subr.mxu0 %v667
        %1434 = vmatpush1.msra.mxu0 %v666
        %1435 = vmatprep.subr.mxu0 %v664
        %1436 = vmatpush1.msra.mxu0 %v663
        %1437 = vmatprep.subr.mxu0 %v661
        %1438 = vmatpush1.msra.mxu0 %v660
        %1439 = vmatprep.subr.mxu0 %v658
        %1440 = vmatpush1.msra.mxu0 %v657
        %1441 = vmatprep.subr.mxu0 %v751
        %1442 = vmatpush2.msra.mxu0 %v750
        %1443 = vmatprep.subr.mxu0 %v748
        %1444 = vmatpush2.msra.mxu0 %v747
        %1445 = vmatprep.subr.mxu0 %v745
        %1446 = vmatpush2.msra.mxu0 %v744
        %1447 = vmatprep.subr.mxu0 %v742
        %1448 = vmatpush2.msra.mxu0 %v741
        %1449 = vmatprep.subr.mxu0 %v739
        %1450 = vmatpush2.msra.mxu0 %v738
        %1451 = vmatprep.subr.mxu0 %v736
        %1452 = vmatpush2.msra.mxu0 %v735
        %1453 = vmatprep.subr.mxu0 %v733
        %1454 = vmatpush2.msra.mxu0 %v732
        %1455 = vmatprep.subr.mxu0 %v730
        %1456 = vmatpush2.msra.mxu0 %v729
        %1457 = vmatprep.subr.mxu0 %v727
        %1458 = vmatpush2.msra.mxu0 %v726
        %1459 = vmatprep.subr.mxu0 %v724
        %1460 = vmatpush2.msra.mxu0 %v723
        %1461 = vmatprep.subr.mxu0 %v721
        %1462 = vmatpush2.msra.mxu0 %v720
        %1463 = vmatprep.subr.mxu0 %v718
        %1464 = vmatpush2.msra.mxu0 %v717
        %1465 = vmatprep.subr.mxu0 %v715
        %1466 = vmatpush2.msra.mxu0 %v714
        %1467 = vmatprep.subr.mxu0 %v712
        %1468 = vmatpush2.msra.mxu0 %v711
        %1469 = vmatprep.subr.mxu0 %v709
        %1470 = vmatpush2.msra.mxu0 %v708
        %1471 = vmatprep.subr.mxu0 %v706
        %1472 = vmatpush2.msra.mxu0 %v705
        %1473 = vmatprep.mubr.f32.mxu0 %v208
        %1474 = vmatmul.mubr.f32.gmra.mxu0 %v207
        %v1475 = vpop.f32.mrf.mxu0
        %v1476 = vadd.f32 %v1327, %v1475
        %v1477 = vpop.f32.mrf.mxu0
        %v1478 = vadd.f32 %v1329, %v1477
        %1479 = vmatprep.mubr.f32.mxu0 %v220
        %1480 = vmatmul.mubr.f32.gmra.mxu0 %v219
        %v1481 = vpop.f32.mrf.mxu0
        %v1482 = vadd.f32 %v1333, %v1481
        %v1483 = vpop.f32.mrf.mxu0
        %v1484 = vadd.f32 %v1335, %v1483
        %1485 = vmatprep.mubr.f32.mxu0 %v232
        %1486 = vmatmul.mubr.f32.gmra.mxu0 %v231
        %v1487 = vpop.f32.mrf.mxu0
        %v1488 = vadd.f32 %v1339, %v1487
        %v1489 = vpop.f32.mrf.mxu0
        %v1490 = vadd.f32 %v1341, %v1489
        %1491 = vmatprep.mubr.f32.mxu0 %v244
        %1492 = vmatmul.mubr.f32.gmra.mxu0 %v243
        %v1493 = vpop.f32.mrf.mxu0
        %v1494 = vadd.f32 %v1345, %v1493
        %v1495 = vpop.f32.mrf.mxu0
        %v1496 = vadd.f32 %v1347, %v1495
        %1497 = vmatprep.mubr.f32.mxu0 %v256
        %1498 = vmatmul.mubr.f32.gmra.mxu0 %v255
        %v1499 = vpop.f32.mrf.mxu0
        %v1500 = vadd.f32 %v1351, %v1499
        %v1501 = vpop.f32.mrf.mxu0
        %v1502 = vadd.f32 %v1353, %v1501
        %1503 = vmatprep.mubr.f32.mxu0 %v268
        %1504 = vmatmul.mubr.f32.gmra.mxu0 %v267
        %v1505 = vpop.f32.mrf.mxu0
        %v1506 = vadd.f32 %v1357, %v1505
        %v1507 = vpop.f32.mrf.mxu0
        %v1508 = vadd.f32 %v1359, %v1507
        %1509 = vmatprep.mubr.f32.mxu0 %v280
        %1510 = vmatmul.mubr.f32.gmra.mxu0 %v279
        %v1511 = vpop.f32.mrf.mxu0
        %v1512 = vadd.f32 %v1363, %v1511
        %v1513 = vpop.f32.mrf.mxu0
        %v1514 = vadd.f32 %v1365, %v1513
        %1515 = vmatprep.mubr.f32.mxu0 %v292
        %1516 = vmatmul.mubr.f32.gmra.mxu0 %v291
        %v1517 = vpop.f32.mrf.mxu0
        %v1518 = vadd.f32 %v1369, %v1517
        %v1519 = vpop.f32.mrf.mxu0
        %v1520 = vadd.f32 %v1371, %v1519
        %1521 = vmatprep.mubr.f32.mxu0 %v304
        %1522 = vmatmul.mubr.f32.gmra.mxu0 %v303
        %v1523 = vpop.f32.mrf.mxu0
        %v1524 = vadd.f32 %v1375, %v1523
        %v1525 = vpop.f32.mrf.mxu0
        %v1526 = vadd.f32 %v1377, %v1525
        %1527 = vmatprep.mubr.f32.mxu0 %v316
        %1528 = vmatmul.mubr.f32.gmra.mxu0 %v315
        %v1529 = vpop.f32.mrf.mxu0
        %v1530 = vadd.f32 %v1381, %v1529
        %v1531 = vpop.f32.mrf.mxu0
        %v1532 = vadd.f32 %v1383, %v1531
        %1533 = vmatprep.mubr.f32.mxu0 %v328
        %1534 = vmatmul.mubr.f32.gmra.mxu0 %v327
        %v1535 = vpop.f32.mrf.mxu0
        %v1536 = vadd.f32 %v1387, %v1535
        %v1537 = vpop.f32.mrf.mxu0
        %v1538 = vadd.f32 %v1389, %v1537
        %1539 = vmatprep.mubr.f32.mxu0 %v340
        %1540 = vmatmul.mubr.f32.gmra.mxu0 %v339
        %v1541 = vpop.f32.mrf.mxu0
        %v1542 = vadd.f32 %v1393, %v1541
        %v1543 = vpop.f32.mrf.mxu0
        %v1544 = vadd.f32 %v1395, %v1543
        %1545 = vmatprep.mubr.f32.mxu0 %v352
        %1546 = vmatmul.mubr.f32.gmra.mxu0 %v351
        %v1547 = vpop.f32.mrf.mxu0
        %v1548 = vadd.f32 %v1399, %v1547
        %v1549 = vpop.f32.mrf.mxu0
        %v1550 = vadd.f32 %v1401, %v1549
        %1551 = vmatprep.mubr.f32.mxu0 %v364
        %1552 = vmatmul.mubr.f32.gmra.mxu0 %v363
        %v1553 = vpop.f32.mrf.mxu0
        %v1554 = vadd.f32 %v1405, %v1553
        %v1555 = vpop.f32.mrf.mxu0
        %v1556 = vadd.f32 %v1407, %v1555
        %1557 = vdwg.mxu0
        %1558 = vmatprep.subr.mxu0 %v799
        %1559 = vmatpush1.msra.mxu0 %v798
        %1560 = vmatprep.subr.mxu0 %v796
        %1561 = vmatpush1.msra.mxu0 %v795
        %1562 = vmatprep.subr.mxu0 %v793
        %1563 = vmatpush1.msra.mxu0 %v792
        %1564 = vmatprep.subr.mxu0 %v790
        %1565 = vmatpush1.msra.mxu0 %v789
        %1566 = vmatprep.subr.mxu0 %v787
        %1567 = vmatpush1.msra.mxu0 %v786
        %1568 = vmatprep.subr.mxu0 %v784
        %1569 = vmatpush1.msra.mxu0 %v783
        %1570 = vmatprep.subr.mxu0 %v781
        %1571 = vmatpush1.msra.mxu0 %v780
        %1572 = vmatprep.subr.mxu0 %v778
        %1573 = vmatpush1.msra.mxu0 %v777
        %1574 = vmatprep.subr.mxu0 %v775
        %1575 = vmatpush1.msra.mxu0 %v774
        %1576 = vmatprep.subr.mxu0 %v772
        %1577 = vmatpush1.msra.mxu0 %v771
        %1578 = vmatprep.subr.mxu0 %v769
        %1579 = vmatpush1.msra.mxu0 %v768
        %1580 = vmatprep.subr.mxu0 %v766
        %1581 = vmatpush1.msra.mxu0 %v765
        %1582 = vmatprep.subr.mxu0 %v763
        %1583 = vmatpush1.msra.mxu0 %v762
        %1584 = vmatprep.subr.mxu0 %v760
        %1585 = vmatpush1.msra.mxu0 %v759
        %1586 = vmatprep.subr.mxu0 %v757
        %1587 = vmatpush1.msra.mxu0 %v756
        %1588 = vmatprep.subr.mxu0 %v754
        %1589 = vmatpush1.msra.mxu0 %v753
        %1590 = vmatprep.subr.mxu0 %v847
        %1591 = vmatpush2.msra.mxu0 %v846
        %1592 = vmatprep.subr.mxu0 %v844
        %1593 = vmatpush2.msra.mxu0 %v843
        %1594 = vmatprep.subr.mxu0 %v841
        %1595 = vmatpush2.msra.mxu0 %v840
        %1596 = vmatprep.subr.mxu0 %v838
        %1597 = vmatpush2.msra.mxu0 %v837
        %1598 = vmatprep.subr.mxu0 %v835
        %1599 = vmatpush2.msra.mxu0 %v834
        %1600 = vmatprep.subr.mxu0 %v832
        %1601 = vmatpush2.msra.mxu0 %v831
        %1602 = vmatprep.subr.mxu0 %v829
        %1603 = vmatpush2.msra.mxu0 %v828
        %1604 = vmatprep.subr.mxu0 %v826
        %1605 = vmatpush2.msra.mxu0 %v825
        %1606 = vmatprep.subr.mxu0 %v823
        %1607 = vmatpush2.msra.mxu0 %v822
        %1608 = vmatprep.subr.mxu0 %v820
        %1609 = vmatpush2.msra.mxu0 %v819
        %1610 = vmatprep.subr.mxu0 %v817
        %1611 = vmatpush2.msra.mxu0 %v816
        %1612 = vmatprep.subr.mxu0 %v814
        %1613 = vmatpush2.msra.mxu0 %v813
        %1614 = vmatprep.subr.mxu0 %v811
        %1615 = vmatpush2.msra.mxu0 %v810
        %1616 = vmatprep.subr.mxu0 %v808
        %1617 = vmatpush2.msra.mxu0 %v807
        %1618 = vmatprep.subr.mxu0 %v805
        %1619 = vmatpush2.msra.mxu0 %v804
        %1620 = vmatprep.subr.mxu0 %v802
        %1621 = vmatpush2.msra.mxu0 %v801
        %1622 = vmatprep.mubr.f32.mxu0 %v210
        %1623 = vmatmul.mubr.f32.gmra.mxu0 %v209
        %v1624 = vpop.f32.mrf.mxu0
        %v1625 = vadd.f32 %v1476, %v1624
        %v1626 = vpop.f32.mrf.mxu0
        %v1627 = vadd.f32 %v1478, %v1626
        %1628 = vmatprep.mubr.f32.mxu0 %v222
        %1629 = vmatmul.mubr.f32.gmra.mxu0 %v221
        %v1630 = vpop.f32.mrf.mxu0
        %v1631 = vadd.f32 %v1482, %v1630
        %v1632 = vpop.f32.mrf.mxu0
        %v1633 = vadd.f32 %v1484, %v1632
        %1634 = vmatprep.mubr.f32.mxu0 %v234
        %1635 = vmatmul.mubr.f32.gmra.mxu0 %v233
        %v1636 = vpop.f32.mrf.mxu0
        %v1637 = vadd.f32 %v1488, %v1636
        %v1638 = vpop.f32.mrf.mxu0
        %v1639 = vadd.f32 %v1490, %v1638
        %1640 = vmatprep.mubr.f32.mxu0 %v246
        %1641 = vmatmul.mubr.f32.gmra.mxu0 %v245
        %v1642 = vpop.f32.mrf.mxu0
        %v1643 = vadd.f32 %v1494, %v1642
        %v1644 = vpop.f32.mrf.mxu0
        %v1645 = vadd.f32 %v1496, %v1644
        %1646 = vmatprep.mubr.f32.mxu0 %v258
        %1647 = vmatmul.mubr.f32.gmra.mxu0 %v257
        %v1648 = vpop.f32.mrf.mxu0
        %v1649 = vadd.f32 %v1500, %v1648
        %v1650 = vpop.f32.mrf.mxu0
        %v1651 = vadd.f32 %v1502, %v1650
        %1652 = vmatprep.mubr.f32.mxu0 %v270
        %1653 = vmatmul.mubr.f32.gmra.mxu0 %v269
        %v1654 = vpop.f32.mrf.mxu0
        %v1655 = vadd.f32 %v1506, %v1654
        %v1656 = vpop.f32.mrf.mxu0
        %v1657 = vadd.f32 %v1508, %v1656
        %1658 = vmatprep.mubr.f32.mxu0 %v282
        %1659 = vmatmul.mubr.f32.gmra.mxu0 %v281
        %v1660 = vpop.f32.mrf.mxu0
        %v1661 = vadd.f32 %v1512, %v1660
        %v1662 = vpop.f32.mrf.mxu0
        %v1663 = vadd.f32 %v1514, %v1662
        %1664 = vmatprep.mubr.f32.mxu0 %v294
        %1665 = vmatmul.mubr.f32.gmra.mxu0 %v293
        %v1666 = vpop.f32.mrf.mxu0
        %v1667 = vadd.f32 %v1518, %v1666
        %v1668 = vpop.f32.mrf.mxu0
        %v1669 = vadd.f32 %v1520, %v1668
        %1670 = vmatprep.mubr.f32.mxu0 %v306
        %1671 = vmatmul.mubr.f32.gmra.mxu0 %v305
        %v1672 = vpop.f32.mrf.mxu0
        %v1673 = vadd.f32 %v1524, %v1672
        %v1674 = vpop.f32.mrf.mxu0
        %v1675 = vadd.f32 %v1526, %v1674
        %1676 = vmatprep.mubr.f32.mxu0 %v318
        %1677 = vmatmul.mubr.f32.gmra.mxu0 %v317
        %v1678 = vpop.f32.mrf.mxu0
        %v1679 = vadd.f32 %v1530, %v1678
        %v1680 = vpop.f32.mrf.mxu0
        %v1681 = vadd.f32 %v1532, %v1680
        %1682 = vmatprep.mubr.f32.mxu0 %v330
        %1683 = vmatmul.mubr.f32.gmra.mxu0 %v329
        %v1684 = vpop.f32.mrf.mxu0
        %v1685 = vadd.f32 %v1536, %v1684
        %v1686 = vpop.f32.mrf.mxu0
        %v1687 = vadd.f32 %v1538, %v1686
        %1688 = vmatprep.mubr.f32.mxu0 %v342
        %1689 = vmatmul.mubr.f32.gmra.mxu0 %v341
        %v1690 = vpop.f32.mrf.mxu0
        %v1691 = vadd.f32 %v1542, %v1690
        %v1692 = vpop.f32.mrf.mxu0
        %v1693 = vadd.f32 %v1544, %v1692
        %1694 = vmatprep.mubr.f32.mxu0 %v354
        %1695 = vmatmul.mubr.f32.gmra.mxu0 %v353
        %v1696 = vpop.f32.mrf.mxu0
        %v1697 = vadd.f32 %v1548, %v1696
        %v1698 = vpop.f32.mrf.mxu0
        %v1699 = vadd.f32 %v1550, %v1698
        %1700 = vmatprep.mubr.f32.mxu0 %v366
        %1701 = vmatmul.mubr.f32.gmra.mxu0 %v365
        %v1702 = vpop.f32.mrf.mxu0
        %v1703 = vadd.f32 %v1554, %v1702
        %v1704 = vpop.f32.mrf.mxu0
        %v1705 = vadd.f32 %v1556, %v1704
        %1706 = vdwg.mxu0
        %1707 = vmatprep.subr.mxu0 %v895
        %1708 = vmatpush1.msra.mxu0 %v894
        %1709 = vmatprep.subr.mxu0 %v892
        %1710 = vmatpush1.msra.mxu0 %v891
        %1711 = vmatprep.subr.mxu0 %v889
        %1712 = vmatpush1.msra.mxu0 %v888
        %1713 = vmatprep.subr.mxu0 %v886
        %1714 = vmatpush1.msra.mxu0 %v885
        %1715 = vmatprep.subr.mxu0 %v883
        %1716 = vmatpush1.msra.mxu0 %v882
        %1717 = vmatprep.subr.mxu0 %v880
        %1718 = vmatpush1.msra.mxu0 %v879
        %1719 = vmatprep.subr.mxu0 %v877
        %1720 = vmatpush1.msra.mxu0 %v876
        %1721 = vmatprep.subr.mxu0 %v874
        %1722 = vmatpush1.msra.mxu0 %v873
        %1723 = vmatprep.subr.mxu0 %v871
        %1724 = vmatpush1.msra.mxu0 %v870
        %1725 = vmatprep.subr.mxu0 %v868
        %1726 = vmatpush1.msra.mxu0 %v867
        %1727 = vmatprep.subr.mxu0 %v865
        %1728 = vmatpush1.msra.mxu0 %v864
        %1729 = vmatprep.subr.mxu0 %v862
        %1730 = vmatpush1.msra.mxu0 %v861
        %1731 = vmatprep.subr.mxu0 %v859
        %1732 = vmatpush1.msra.mxu0 %v858
        %1733 = vmatprep.subr.mxu0 %v856
        %1734 = vmatpush1.msra.mxu0 %v855
        %1735 = vmatprep.subr.mxu0 %v853
        %1736 = vmatpush1.msra.mxu0 %v852
        %1737 = vmatprep.subr.mxu0 %v850
        %1738 = vmatpush1.msra.mxu0 %v849
        %1739 = vmatprep.subr.mxu0 %v943
        %1740 = vmatpush2.msra.mxu0 %v942
        %1741 = vmatprep.subr.mxu0 %v940
        %1742 = vmatpush2.msra.mxu0 %v939
        %1743 = vmatprep.subr.mxu0 %v937
        %1744 = vmatpush2.msra.mxu0 %v936
        %1745 = vmatprep.subr.mxu0 %v934
        %1746 = vmatpush2.msra.mxu0 %v933
        %1747 = vmatprep.subr.mxu0 %v931
        %1748 = vmatpush2.msra.mxu0 %v930
        %1749 = vmatprep.subr.mxu0 %v928
        %1750 = vmatpush2.msra.mxu0 %v927
        %1751 = vmatprep.subr.mxu0 %v925
        %1752 = vmatpush2.msra.mxu0 %v924
        %1753 = vmatprep.subr.mxu0 %v922
        %1754 = vmatpush2.msra.mxu0 %v921
        %1755 = vmatprep.subr.mxu0 %v919
        %1756 = vmatpush2.msra.mxu0 %v918
        %1757 = vmatprep.subr.mxu0 %v916
        %1758 = vmatpush2.msra.mxu0 %v915
        %1759 = vmatprep.subr.mxu0 %v913
        %1760 = vmatpush2.msra.mxu0 %v912
        %1761 = vmatprep.subr.mxu0 %v910
        %1762 = vmatpush2.msra.mxu0 %v909
        %1763 = vmatprep.subr.mxu0 %v907
        %1764 = vmatpush2.msra.mxu0 %v906
        %1765 = vmatprep.subr.mxu0 %v904
        %1766 = vmatpush2.msra.mxu0 %v903
        %1767 = vmatprep.subr.mxu0 %v901
        %1768 = vmatpush2.msra.mxu0 %v900
        %1769 = vmatprep.subr.mxu0 %v898
        %1770 = vmatpush2.msra.mxu0 %v897
        %1771 = vmatprep.mubr.f32.mxu0 %v212
        %1772 = vmatmul.mubr.f32.gmra.mxu0 %v211
        %v1773 = vpop.f32.mrf.mxu0
        %v1774 = vadd.f32 %v1625, %v1773
        %v1775 = vpop.f32.mrf.mxu0
        %v1776 = vadd.f32 %v1627, %v1775
        %1777 = vmatprep.mubr.f32.mxu0 %v224
        %1778 = vmatmul.mubr.f32.gmra.mxu0 %v223
        %v1779 = vpop.f32.mrf.mxu0
        %v1780 = vadd.f32 %v1631, %v1779
        %v1781 = vpop.f32.mrf.mxu0
        %v1782 = vadd.f32 %v1633, %v1781
        %1783 = vmatprep.mubr.f32.mxu0 %v236
        %1784 = vmatmul.mubr.f32.gmra.mxu0 %v235
        %v1785 = vpop.f32.mrf.mxu0
        %v1786 = vadd.f32 %v1637, %v1785
        %v1787 = vpop.f32.mrf.mxu0
        %v1788 = vadd.f32 %v1639, %v1787
        %1789 = vmatprep.mubr.f32.mxu0 %v248
        %1790 = vmatmul.mubr.f32.gmra.mxu0 %v247
        %v1791 = vpop.f32.mrf.mxu0
        %v1792 = vadd.f32 %v1643, %v1791
        %v1793 = vpop.f32.mrf.mxu0
        %v1794 = vadd.f32 %v1645, %v1793
        %1795 = vmatprep.mubr.f32.mxu0 %v260
        %1796 = vmatmul.mubr.f32.gmra.mxu0 %v259
        %v1797 = vpop.f32.mrf.mxu0
        %v1798 = vadd.f32 %v1649, %v1797
        %v1799 = vpop.f32.mrf.mxu0
        %v1800 = vadd.f32 %v1651, %v1799
        %1801 = vmatprep.mubr.f32.mxu0 %v272
        %1802 = vmatmul.mubr.f32.gmra.mxu0 %v271
        %v1803 = vpop.f32.mrf.mxu0
        %v1804 = vadd.f32 %v1655, %v1803
        %v1805 = vpop.f32.mrf.mxu0
        %v1806 = vadd.f32 %v1657, %v1805
        %1807 = vmatprep.mubr.f32.mxu0 %v284
        %1808 = vmatmul.mubr.f32.gmra.mxu0 %v283
        %v1809 = vpop.f32.mrf.mxu0
        %v1810 = vadd.f32 %v1661, %v1809
        %v1811 = vpop.f32.mrf.mxu0
        %v1812 = vadd.f32 %v1663, %v1811
        %1813 = vmatprep.mubr.f32.mxu0 %v296
        %1814 = vmatmul.mubr.f32.gmra.mxu0 %v295
        %v1815 = vpop.f32.mrf.mxu0
        %v1816 = vadd.f32 %v1667, %v1815
        %v1817 = vpop.f32.mrf.mxu0
        %v1818 = vadd.f32 %v1669, %v1817
        %1819 = vmatprep.mubr.f32.mxu0 %v308
        %1820 = vmatmul.mubr.f32.gmra.mxu0 %v307
        %v1821 = vpop.f32.mrf.mxu0
        %v1822 = vadd.f32 %v1673, %v1821
        %v1823 = vpop.f32.mrf.mxu0
        %v1824 = vadd.f32 %v1675, %v1823
        %1825 = vmatprep.mubr.f32.mxu0 %v320
        %1826 = vmatmul.mubr.f32.gmra.mxu0 %v319
        %v1827 = vpop.f32.mrf.mxu0
        %v1828 = vadd.f32 %v1679, %v1827
        %v1829 = vpop.f32.mrf.mxu0
        %v1830 = vadd.f32 %v1681, %v1829
        %1831 = vmatprep.mubr.f32.mxu0 %v332
        %1832 = vmatmul.mubr.f32.gmra.mxu0 %v331
        %v1833 = vpop.f32.mrf.mxu0
        %v1834 = vadd.f32 %v1685, %v1833
        %v1835 = vpop.f32.mrf.mxu0
        %v1836 = vadd.f32 %v1687, %v1835
        %1837 = vmatprep.mubr.f32.mxu0 %v344
        %1838 = vmatmul.mubr.f32.gmra.mxu0 %v343
        %v1839 = vpop.f32.mrf.mxu0
        %v1840 = vadd.f32 %v1691, %v1839
        %v1841 = vpop.f32.mrf.mxu0
        %v1842 = vadd.f32 %v1693, %v1841
        %1843 = vmatprep.mubr.f32.mxu0 %v356
        %1844 = vmatmul.mubr.f32.gmra.mxu0 %v355
        %v1845 = vpop.f32.mrf.mxu0
        %v1846 = vadd.f32 %v1697, %v1845
        %v1847 = vpop.f32.mrf.mxu0
        %v1848 = vadd.f32 %v1699, %v1847
        %1849 = vmatprep.mubr.f32.mxu0 %v368
        %1850 = vmatmul.mubr.f32.gmra.mxu0 %v367
        %v1851 = vpop.f32.mrf.mxu0
        %v1852 = vadd.f32 %v1703, %v1851
        %v1853 = vpop.f32.mrf.mxu0
        %v1854 = vadd.f32 %v1705, %v1853
        %1855 = vdwg.mxu0
        %1856 = vmatprep.subr.mxu0 0.0
        %1857 = vmatpush1.msra.mxu0 %v416
        %1858 = vmatprep.subr.mxu0 0.0
        %1859 = vmatpush1.msra.mxu0 %v413
        %1860 = vmatprep.subr.mxu0 0.0
        %1861 = vmatpush1.msra.mxu0 %v410
        %1862 = vmatprep.subr.mxu0 0.0
        %1863 = vmatpush1.msra.mxu0 %v407
        %1864 = vmatprep.subr.mxu0 0.0
        %1865 = vmatpush1.msra.mxu0 %v404
        %1866 = vmatprep.subr.mxu0 0.0
        %1867 = vmatpush1.msra.mxu0 %v401
        %1868 = vmatprep.subr.mxu0 0.0
        %1869 = vmatpush1.msra.mxu0 %v398
        %1870 = vmatprep.subr.mxu0 0.0
        %1871 = vmatpush1.msra.mxu0 %v395
        %1872 = vmatprep.subr.mxu0 0.0
        %1873 = vmatpush1.msra.mxu0 %v392
        %1874 = vmatprep.subr.mxu0 0.0
        %1875 = vmatpush1.msra.mxu0 %v389
        %1876 = vmatprep.subr.mxu0 0.0
        %1877 = vmatpush1.msra.mxu0 %v386
        %1878 = vmatprep.subr.mxu0 0.0
        %1879 = vmatpush1.msra.mxu0 %v383
        %1880 = vmatprep.subr.mxu0 0.0
        %1881 = vmatpush1.msra.mxu0 %v380
        %1882 = vmatprep.subr.mxu0 0.0
        %1883 = vmatpush1.msra.mxu0 %v377
        %1884 = vmatprep.subr.mxu0 0.0
        %1885 = vmatpush1.msra.mxu0 %v374
        %1886 = vmatprep.subr.mxu0 0.0
        %1887 = vmatpush1.msra.mxu0 %v371
        %1888 = vmatprep.subr.mxu0 0.0
        %1889 = vmatpush2.msra.mxu0 %v464
        %1890 = vmatprep.subr.mxu0 0.0
        %1891 = vmatpush2.msra.mxu0 %v461
        %1892 = vmatprep.subr.mxu0 0.0
        %1893 = vmatpush2.msra.mxu0 %v458
        %1894 = vmatprep.subr.mxu0 0.0
        %1895 = vmatpush2.msra.mxu0 %v455
        %1896 = vmatprep.subr.mxu0 0.0
        %1897 = vmatpush2.msra.mxu0 %v452
        %1898 = vmatprep.subr.mxu0 0.0
        %1899 = vmatpush2.msra.mxu0 %v449
        %1900 = vmatprep.subr.mxu0 0.0
        %1901 = vmatpush2.msra.mxu0 %v446
        %1902 = vmatprep.subr.mxu0 0.0
        %1903 = vmatpush2.msra.mxu0 %v443
        %1904 = vmatprep.subr.mxu0 0.0
        %1905 = vmatpush2.msra.mxu0 %v440
        %1906 = vmatprep.subr.mxu0 0.0
        %1907 = vmatpush2.msra.mxu0 %v437
        %1908 = vmatprep.subr.mxu0 0.0
        %1909 = vmatpush2.msra.mxu0 %v434
        %1910 = vmatprep.subr.mxu0 0.0
        %1911 = vmatpush2.msra.mxu0 %v431
        %1912 = vmatprep.subr.mxu0 0.0
        %1913 = vmatpush2.msra.mxu0 %v428
        %1914 = vmatprep.subr.mxu0 0.0
        %1915 = vmatpush2.msra.mxu0 %v425
        %1916 = vmatprep.subr.mxu0 0.0
        %1917 = vmatpush2.msra.mxu0 %v422
        %1918 = vmatprep.subr.mxu0 0.0
        %1919 = vmatpush2.msra.mxu0 %v419
        %1920 = vmatprep.mubr.f32.mxu0 %v202
        %1921 = vmatmul.mubr.f32.gmra.mxu0 %v201
        %v1922 = vpop.f32.mrf.mxu0
        %v1923 = vadd.f32 %v958, %v1922
        %v1924 = vpop.f32.mrf.mxu0
        %1925 = vmatprep.mubr.f32.mxu0 %v214
        %1926 = vmatmul.mubr.f32.gmra.mxu0 %v213
        %v1927 = vpop.f32.mrf.mxu0
        %v1928 = vadd.f32 %v958, %v1927
        %v1929 = vpop.f32.mrf.mxu0
        %1930 = vmatprep.mubr.f32.mxu0 %v226
        %1931 = vmatmul.mubr.f32.gmra.mxu0 %v225
        %v1932 = vpop.f32.mrf.mxu0
        %v1933 = vadd.f32 %v958, %v1932
        %v1934 = vpop.f32.mrf.mxu0
        %1935 = vmatprep.mubr.f32.mxu0 %v238
        %1936 = vmatmul.mubr.f32.gmra.mxu0 %v237
        %v1937 = vpop.f32.mrf.mxu0
        %v1938 = vadd.f32 %v958, %v1937
        %v1939 = vpop.f32.mrf.mxu0
        %1940 = vmatprep.mubr.f32.mxu0 %v250
        %1941 = vmatmul.mubr.f32.gmra.mxu0 %v249
        %v1942 = vpop.f32.mrf.mxu0
        %v1943 = vadd.f32 %v958, %v1942
        %v1944 = vpop.f32.mrf.mxu0
        %1945 = vmatprep.mubr.f32.mxu0 %v262
        %1946 = vmatmul.mubr.f32.gmra.mxu0 %v261
        %v1947 = vpop.f32.mrf.mxu0
        %v1948 = vadd.f32 %v958, %v1947
        %v1949 = vpop.f32.mrf.mxu0
        %1950 = vmatprep.mubr.f32.mxu0 %v274
        %1951 = vmatmul.mubr.f32.gmra.mxu0 %v273
        %v1952 = vpop.f32.mrf.mxu0
        %v1953 = vadd.f32 %v958, %v1952
        %v1954 = vpop.f32.mrf.mxu0
        %1955 = vmatprep.mubr.f32.mxu0 %v286
        %1956 = vmatmul.mubr.f32.gmra.mxu0 %v285
        %v1957 = vpop.f32.mrf.mxu0
        %v1958 = vadd.f32 %v958, %v1957
        %v1959 = vpop.f32.mrf.mxu0
        %1960 = vmatprep.mubr.f32.mxu0 %v298
        %1961 = vmatmul.mubr.f32.gmra.mxu0 %v297
        %v1962 = vpop.f32.mrf.mxu0
        %v1963 = vadd.f32 %v958, %v1962
        %v1964 = vpop.f32.mrf.mxu0
        %1965 = vmatprep.mubr.f32.mxu0 %v310
        %1966 = vmatmul.mubr.f32.gmra.mxu0 %v309
        %v1967 = vpop.f32.mrf.mxu0
        %v1968 = vadd.f32 %v958, %v1967
        %v1969 = vpop.f32.mrf.mxu0
        %1970 = vmatprep.mubr.f32.mxu0 %v322
        %1971 = vmatmul.mubr.f32.gmra.mxu0 %v321
        %v1972 = vpop.f32.mrf.mxu0
        %v1973 = vadd.f32 %v958, %v1972
        %v1974 = vpop.f32.mrf.mxu0
        %1975 = vmatprep.mubr.f32.mxu0 %v334
        %1976 = vmatmul.mubr.f32.gmra.mxu0 %v333
        %v1977 = vpop.f32.mrf.mxu0
        %v1978 = vadd.f32 %v958, %v1977
        %v1979 = vpop.f32.mrf.mxu0
        %1980 = vmatprep.mubr.f32.mxu0 %v346
        %1981 = vmatmul.mubr.f32.gmra.mxu0 %v345
        %v1982 = vpop.f32.mrf.mxu0
        %v1983 = vadd.f32 %v958, %v1982
        %v1984 = vpop.f32.mrf.mxu0
        %1985 = vmatprep.mubr.f32.mxu0 %v358
        %1986 = vmatmul.mubr.f32.gmra.mxu0 %v357
        %v1987 = vpop.f32.mrf.mxu0
        %v1988 = vadd.f32 %v958, %v1987
        %v1989 = vpop.f32.mrf.mxu0
        %1990 = vdwg.mxu0
        %1991 = vmatprep.subr.mxu0 0.0
        %1992 = vmatpush1.msra.mxu0 %v512
        %1993 = vmatprep.subr.mxu0 0.0
        %1994 = vmatpush1.msra.mxu0 %v509
        %1995 = vmatprep.subr.mxu0 0.0
        %1996 = vmatpush1.msra.mxu0 %v506
        %1997 = vmatprep.subr.mxu0 0.0
        %1998 = vmatpush1.msra.mxu0 %v503
        %1999 = vmatprep.subr.mxu0 0.0
        %2000 = vmatpush1.msra.mxu0 %v500
        %2001 = vmatprep.subr.mxu0 0.0
        %2002 = vmatpush1.msra.mxu0 %v497
        %2003 = vmatprep.subr.mxu0 0.0
        %2004 = vmatpush1.msra.mxu0 %v494
        %2005 = vmatprep.subr.mxu0 0.0
        %2006 = vmatpush1.msra.mxu0 %v491
        %2007 = vmatprep.subr.mxu0 0.0
        %2008 = vmatpush1.msra.mxu0 %v488
        %2009 = vmatprep.subr.mxu0 0.0
        %2010 = vmatpush1.msra.mxu0 %v485
        %2011 = vmatprep.subr.mxu0 0.0
        %2012 = vmatpush1.msra.mxu0 %v482
        %2013 = vmatprep.subr.mxu0 0.0
        %2014 = vmatpush1.msra.mxu0 %v479
        %2015 = vmatprep.subr.mxu0 0.0
        %2016 = vmatpush1.msra.mxu0 %v476
        %2017 = vmatprep.subr.mxu0 0.0
        %2018 = vmatpush1.msra.mxu0 %v473
        %2019 = vmatprep.subr.mxu0 0.0
        %2020 = vmatpush1.msra.mxu0 %v470
        %2021 = vmatprep.subr.mxu0 0.0
        %2022 = vmatpush1.msra.mxu0 %v467
        %2023 = vmatprep.subr.mxu0 0.0
        %2024 = vmatpush2.msra.mxu0 %v560
        %2025 = vmatprep.subr.mxu0 0.0
        %2026 = vmatpush2.msra.mxu0 %v557
        %2027 = vmatprep.subr.mxu0 0.0
        %2028 = vmatpush2.msra.mxu0 %v554
        %2029 = vmatprep.subr.mxu0 0.0
        %2030 = vmatpush2.msra.mxu0 %v551
        %2031 = vmatprep.subr.mxu0 0.0
        %2032 = vmatpush2.msra.mxu0 %v548
        %2033 = vmatprep.subr.mxu0 0.0
        %2034 = vmatpush2.msra.mxu0 %v545
        %2035 = vmatprep.subr.mxu0 0.0
        %2036 = vmatpush2.msra.mxu0 %v542
        %2037 = vmatprep.subr.mxu0 0.0
        %2038 = vmatpush2.msra.mxu0 %v539
        %2039 = vmatprep.subr.mxu0 0.0
        %2040 = vmatpush2.msra.mxu0 %v536
        %2041 = vmatprep.subr.mxu0 0.0
        %2042 = vmatpush2.msra.mxu0 %v533
        %2043 = vmatprep.subr.mxu0 0.0
        %2044 = vmatpush2.msra.mxu0 %v530
        %2045 = vmatprep.subr.mxu0 0.0
        %2046 = vmatpush2.msra.mxu0 %v527
        %2047 = vmatprep.subr.mxu0 0.0
        %2048 = vmatpush2.msra.mxu0 %v524
        %2049 = vmatprep.subr.mxu0 0.0
        %2050 = vmatpush2.msra.mxu0 %v521
        %2051 = vmatprep.subr.mxu0 0.0
        %2052 = vmatpush2.msra.mxu0 %v518
        %2053 = vmatprep.subr.mxu0 0.0
        %2054 = vmatpush2.msra.mxu0 %v515
        %2055 = vmatprep.mubr.f32.mxu0 %v204
        %2056 = vmatmul.mubr.f32.gmra.mxu0 %v203
        %v2057 = vpop.f32.mrf.mxu0
        %v2058 = vadd.f32 %v1923, %v2057
        %v2059 = vpop.f32.mrf.mxu0
        %2060 = vmatprep.mubr.f32.mxu0 %v216
        %2061 = vmatmul.mubr.f32.gmra.mxu0 %v215
        %v2062 = vpop.f32.mrf.mxu0
        %v2063 = vadd.f32 %v1928, %v2062
        %v2064 = vpop.f32.mrf.mxu0
        %2065 = vmatprep.mubr.f32.mxu0 %v228
        %2066 = vmatmul.mubr.f32.gmra.mxu0 %v227
        %v2067 = vpop.f32.mrf.mxu0
        %v2068 = vadd.f32 %v1933, %v2067
        %v2069 = vpop.f32.mrf.mxu0
        %2070 = vmatprep.mubr.f32.mxu0 %v240
        %2071 = vmatmul.mubr.f32.gmra.mxu0 %v239
        %v2072 = vpop.f32.mrf.mxu0
        %v2073 = vadd.f32 %v1938, %v2072
        %v2074 = vpop.f32.mrf.mxu0
        %2075 = vmatprep.mubr.f32.mxu0 %v252
        %2076 = vmatmul.mubr.f32.gmra.mxu0 %v251
        %v2077 = vpop.f32.mrf.mxu0
        %v2078 = vadd.f32 %v1943, %v2077
        %v2079 = vpop.f32.mrf.mxu0
        %2080 = vmatprep.mubr.f32.mxu0 %v264
        %2081 = vmatmul.mubr.f32.gmra.mxu0 %v263
        %v2082 = vpop.f32.mrf.mxu0
        %v2083 = vadd.f32 %v1948, %v2082
        %v2084 = vpop.f32.mrf.mxu0
        %2085 = vmatprep.mubr.f32.mxu0 %v276
        %2086 = vmatmul.mubr.f32.gmra.mxu0 %v275
        %v2087 = vpop.f32.mrf.mxu0
        %v2088 = vadd.f32 %v1953, %v2087
        %v2089 = vpop.f32.mrf.mxu0
        %2090 = vmatprep.mubr.f32.mxu0 %v288
        %2091 = vmatmul.mubr.f32.gmra.mxu0 %v287
        %v2092 = vpop.f32.mrf.mxu0
        %v2093 = vadd.f32 %v1958, %v2092
        %v2094 = vpop.f32.mrf.mxu0
        %2095 = vmatprep.mubr.f32.mxu0 %v300
        %2096 = vmatmul.mubr.f32.gmra.mxu0 %v299
        %v2097 = vpop.f32.mrf.mxu0
        %v2098 = vadd.f32 %v1963, %v2097
        %v2099 = vpop.f32.mrf.mxu0
        %2100 = vmatprep.mubr.f32.mxu0 %v312
        %2101 = vmatmul.mubr.f32.gmra.mxu0 %v311
        %v2102 = vpop.f32.mrf.mxu0
        %v2103 = vadd.f32 %v1968, %v2102
        %v2104 = vpop.f32.mrf.mxu0
        %2105 = vmatprep.mubr.f32.mxu0 %v324
        %2106 = vmatmul.mubr.f32.gmra.mxu0 %v323
        %v2107 = vpop.f32.mrf.mxu0
        %v2108 = vadd.f32 %v1973, %v2107
        %v2109 = vpop.f32.mrf.mxu0
        %2110 = vmatprep.mubr.f32.mxu0 %v336
        %2111 = vmatmul.mubr.f32.gmra.mxu0 %v335
        %v2112 = vpop.f32.mrf.mxu0
        %v2113 = vadd.f32 %v1978, %v2112
        %v2114 = vpop.f32.mrf.mxu0
        %2115 = vmatprep.mubr.f32.mxu0 %v348
        %2116 = vmatmul.mubr.f32.gmra.mxu0 %v347
        %v2117 = vpop.f32.mrf.mxu0
        %v2118 = vadd.f32 %v1983, %v2117
        %v2119 = vpop.f32.mrf.mxu0
        %2120 = vmatprep.mubr.f32.mxu0 %v360
        %2121 = vmatmul.mubr.f32.gmra.mxu0 %v359
        %v2122 = vpop.f32.mrf.mxu0
        %v2123 = vadd.f32 %v1988, %v2122
        %v2124 = vpop.f32.mrf.mxu0
        %2125 = vdwg.mxu0
        %2126 = vmatprep.subr.mxu0 0.0
        %2127 = vmatpush1.msra.mxu0 %v608
        %2128 = vmatprep.subr.mxu0 0.0
        %2129 = vmatpush1.msra.mxu0 %v605
        %2130 = vmatprep.subr.mxu0 0.0
        %2131 = vmatpush1.msra.mxu0 %v602
        %2132 = vmatprep.subr.mxu0 0.0
        %2133 = vmatpush1.msra.mxu0 %v599
        %2134 = vmatprep.subr.mxu0 0.0
        %2135 = vmatpush1.msra.mxu0 %v596
        %2136 = vmatprep.subr.mxu0 0.0
        %2137 = vmatpush1.msra.mxu0 %v593
        %2138 = vmatprep.subr.mxu0 0.0
        %2139 = vmatpush1.msra.mxu0 %v590
        %2140 = vmatprep.subr.mxu0 0.0
        %2141 = vmatpush1.msra.mxu0 %v587
        %2142 = vmatprep.subr.mxu0 0.0
        %2143 = vmatpush1.msra.mxu0 %v584
        %2144 = vmatprep.subr.mxu0 0.0
        %2145 = vmatpush1.msra.mxu0 %v581
        %2146 = vmatprep.subr.mxu0 0.0
        %2147 = vmatpush1.msra.mxu0 %v578
        %2148 = vmatprep.subr.mxu0 0.0
        %2149 = vmatpush1.msra.mxu0 %v575
        %2150 = vmatprep.subr.mxu0 0.0
        %2151 = vmatpush1.msra.mxu0 %v572
        %2152 = vmatprep.subr.mxu0 0.0
        %2153 = vmatpush1.msra.mxu0 %v569
        %2154 = vmatprep.subr.mxu0 0.0
        %2155 = vmatpush1.msra.mxu0 %v566
        %2156 = vmatprep.subr.mxu0 0.0
        %2157 = vmatpush1.msra.mxu0 %v563
        %2158 = vmatprep.subr.mxu0 0.0
        %2159 = vmatpush2.msra.mxu0 %v656
        %2160 = vmatprep.subr.mxu0 0.0
        %2161 = vmatpush2.msra.mxu0 %v653
        %2162 = vmatprep.subr.mxu0 0.0
        %2163 = vmatpush2.msra.mxu0 %v650
        %2164 = vmatprep.subr.mxu0 0.0
        %2165 = vmatpush2.msra.mxu0 %v647
        %2166 = vmatprep.subr.mxu0 0.0
        %2167 = vmatpush2.msra.mxu0 %v644
        %2168 = vmatprep.subr.mxu0 0.0
        %2169 = vmatpush2.msra.mxu0 %v641
        %2170 = vmatprep.subr.mxu0 0.0
        %2171 = vmatpush2.msra.mxu0 %v638
        %2172 = vmatprep.subr.mxu0 0.0
        %2173 = vmatpush2.msra.mxu0 %v635
        %2174 = vmatprep.subr.mxu0 0.0
        %2175 = vmatpush2.msra.mxu0 %v632
        %2176 = vmatprep.subr.mxu0 0.0
        %2177 = vmatpush2.msra.mxu0 %v629
        %2178 = vmatprep.subr.mxu0 0.0
        %2179 = vmatpush2.msra.mxu0 %v626
        %2180 = vmatprep.subr.mxu0 0.0
        %2181 = vmatpush2.msra.mxu0 %v623
        %2182 = vmatprep.subr.mxu0 0.0
        %2183 = vmatpush2.msra.mxu0 %v620
        %2184 = vmatprep.subr.mxu0 0.0
        %2185 = vmatpush2.msra.mxu0 %v617
        %2186 = vmatprep.subr.mxu0 0.0
        %2187 = vmatpush2.msra.mxu0 %v614
        %2188 = vmatprep.subr.mxu0 0.0
        %2189 = vmatpush2.msra.mxu0 %v611
        %2190 = vmatprep.mubr.f32.mxu0 %v206
        %2191 = vmatmul.mubr.f32.gmra.mxu0 %v205
        %v2192 = vpop.f32.mrf.mxu0
        %v2193 = vadd.f32 %v2058, %v2192
        %v2194 = vpop.f32.mrf.mxu0
        %2195 = vmatprep.mubr.f32.mxu0 %v218
        %2196 = vmatmul.mubr.f32.gmra.mxu0 %v217
        %v2197 = vpop.f32.mrf.mxu0
        %v2198 = vadd.f32 %v2063, %v2197
        %v2199 = vpop.f32.mrf.mxu0
        %2200 = vmatprep.mubr.f32.mxu0 %v230
        %2201 = vmatmul.mubr.f32.gmra.mxu0 %v229
        %v2202 = vpop.f32.mrf.mxu0
        %v2203 = vadd.f32 %v2068, %v2202
        %v2204 = vpop.f32.mrf.mxu0
        %2205 = vmatprep.mubr.f32.mxu0 %v242
        %2206 = vmatmul.mubr.f32.gmra.mxu0 %v241
        %v2207 = vpop.f32.mrf.mxu0
        %v2208 = vadd.f32 %v2073, %v2207
        %v2209 = vpop.f32.mrf.mxu0
        %2210 = vmatprep.mubr.f32.mxu0 %v254
        %2211 = vmatmul.mubr.f32.gmra.mxu0 %v253
        %v2212 = vpop.f32.mrf.mxu0
        %v2213 = vadd.f32 %v2078, %v2212
        %v2214 = vpop.f32.mrf.mxu0
        %2215 = vmatprep.mubr.f32.mxu0 %v266
        %2216 = vmatmul.mubr.f32.gmra.mxu0 %v265
        %v2217 = vpop.f32.mrf.mxu0
        %v2218 = vadd.f32 %v2083, %v2217
        %v2219 = vpop.f32.mrf.mxu0
        %2220 = vmatprep.mubr.f32.mxu0 %v278
        %2221 = vmatmul.mubr.f32.gmra.mxu0 %v277
        %v2222 = vpop.f32.mrf.mxu0
        %v2223 = vadd.f32 %v2088, %v2222
        %v2224 = vpop.f32.mrf.mxu0
        %2225 = vmatprep.mubr.f32.mxu0 %v290
        %2226 = vmatmul.mubr.f32.gmra.mxu0 %v289
        %v2227 = vpop.f32.mrf.mxu0
        %v2228 = vadd.f32 %v2093, %v2227
        %v2229 = vpop.f32.mrf.mxu0
        %2230 = vmatprep.mubr.f32.mxu0 %v302
        %2231 = vmatmul.mubr.f32.gmra.mxu0 %v301
        %v2232 = vpop.f32.mrf.mxu0
        %v2233 = vadd.f32 %v2098, %v2232
        %v2234 = vpop.f32.mrf.mxu0
        %2235 = vmatprep.mubr.f32.mxu0 %v314
        %2236 = vmatmul.mubr.f32.gmra.mxu0 %v313
        %v2237 = vpop.f32.mrf.mxu0
        %v2238 = vadd.f32 %v2103, %v2237
        %v2239 = vpop.f32.mrf.mxu0
        %2240 = vmatprep.mubr.f32.mxu0 %v326
        %2241 = vmatmul.mubr.f32.gmra.mxu0 %v325
        %v2242 = vpop.f32.mrf.mxu0
        %v2243 = vadd.f32 %v2108, %v2242
        %v2244 = vpop.f32.mrf.mxu0
        %2245 = vmatprep.mubr.f32.mxu0 %v338
        %2246 = vmatmul.mubr.f32.gmra.mxu0 %v337
        %v2247 = vpop.f32.mrf.mxu0
        %v2248 = vadd.f32 %v2113, %v2247
        %v2249 = vpop.f32.mrf.mxu0
        %2250 = vmatprep.mubr.f32.mxu0 %v350
        %2251 = vmatmul.mubr.f32.gmra.mxu0 %v349
        %v2252 = vpop.f32.mrf.mxu0
        %v2253 = vadd.f32 %v2118, %v2252
        %v2254 = vpop.f32.mrf.mxu0
        %2255 = vmatprep.mubr.f32.mxu0 %v362
        %2256 = vmatmul.mubr.f32.gmra.mxu0 %v361
        %v2257 = vpop.f32.mrf.mxu0
        %v2258 = vadd.f32 %v2123, %v2257
        %v2259 = vpop.f32.mrf.mxu0
        %2260 = vdwg.mxu0
        %2261 = vmatprep.subr.mxu0 0.0
        %2262 = vmatpush1.msra.mxu0 %v704
        %2263 = vmatprep.subr.mxu0 0.0
        %2264 = vmatpush1.msra.mxu0 %v701
        %2265 = vmatprep.subr.mxu0 0.0
        %2266 = vmatpush1.msra.mxu0 %v698
        %2267 = vmatprep.subr.mxu0 0.0
        %2268 = vmatpush1.msra.mxu0 %v695
        %2269 = vmatprep.subr.mxu0 0.0
        %2270 = vmatpush1.msra.mxu0 %v692
        %2271 = vmatprep.subr.mxu0 0.0
        %2272 = vmatpush1.msra.mxu0 %v689
        %2273 = vmatprep.subr.mxu0 0.0
        %2274 = vmatpush1.msra.mxu0 %v686
        %2275 = vmatprep.subr.mxu0 0.0
        %2276 = vmatpush1.msra.mxu0 %v683
        %2277 = vmatprep.subr.mxu0 0.0
        %2278 = vmatpush1.msra.mxu0 %v680
        %2279 = vmatprep.subr.mxu0 0.0
        %2280 = vmatpush1.msra.mxu0 %v677
        %2281 = vmatprep.subr.mxu0 0.0
        %2282 = vmatpush1.msra.mxu0 %v674
        %2283 = vmatprep.subr.mxu0 0.0
        %2284 = vmatpush1.msra.mxu0 %v671
        %2285 = vmatprep.subr.mxu0 0.0
        %2286 = vmatpush1.msra.mxu0 %v668
        %2287 = vmatprep.subr.mxu0 0.0
        %2288 = vmatpush1.msra.mxu0 %v665
        %2289 = vmatprep.subr.mxu0 0.0
        %2290 = vmatpush1.msra.mxu0 %v662
        %2291 = vmatprep.subr.mxu0 0.0
        %2292 = vmatpush1.msra.mxu0 %v659
        %2293 = vmatprep.subr.mxu0 0.0
        %2294 = vmatpush2.msra.mxu0 %v752
        %2295 = vmatprep.subr.mxu0 0.0
        %2296 = vmatpush2.msra.mxu0 %v749
        %2297 = vmatprep.subr.mxu0 0.0
        %2298 = vmatpush2.msra.mxu0 %v746
        %2299 = vmatprep.subr.mxu0 0.0
        %2300 = vmatpush2.msra.mxu0 %v743
        %2301 = vmatprep.subr.mxu0 0.0
        %2302 = vmatpush2.msra.mxu0 %v740
        %2303 = vmatprep.subr.mxu0 0.0
        %2304 = vmatpush2.msra.mxu0 %v737
        %2305 = vmatprep.subr.mxu0 0.0
        %2306 = vmatpush2.msra.mxu0 %v734
        %2307 = vmatprep.subr.mxu0 0.0
        %2308 = vmatpush2.msra.mxu0 %v731
        %2309 = vmatprep.subr.mxu0 0.0
        %2310 = vmatpush2.msra.mxu0 %v728
        %2311 = vmatprep.subr.mxu0 0.0
        %2312 = vmatpush2.msra.mxu0 %v725
        %2313 = vmatprep.subr.mxu0 0.0
        %2314 = vmatpush2.msra.mxu0 %v722
        %2315 = vmatprep.subr.mxu0 0.0
        %2316 = vmatpush2.msra.mxu0 %v719
        %2317 = vmatprep.subr.mxu0 0.0
        %2318 = vmatpush2.msra.mxu0 %v716
        %2319 = vmatprep.subr.mxu0 0.0
        %2320 = vmatpush2.msra.mxu0 %v713
        %2321 = vmatprep.subr.mxu0 0.0
        %2322 = vmatpush2.msra.mxu0 %v710
        %2323 = vmatprep.subr.mxu0 0.0
        %2324 = vmatpush2.msra.mxu0 %v707
        %2325 = vmatprep.mubr.f32.mxu0 %v208
        %2326 = vmatmul.mubr.f32.gmra.mxu0 %v207
        %v2327 = vpop.f32.mrf.mxu0
        %v2328 = vadd.f32 %v2193, %v2327
        %v2329 = vpop.f32.mrf.mxu0
        %2330 = vmatprep.mubr.f32.mxu0 %v220
        %2331 = vmatmul.mubr.f32.gmra.mxu0 %v219
        %v2332 = vpop.f32.mrf.mxu0
        %v2333 = vadd.f32 %v2198, %v2332
        %v2334 = vpop.f32.mrf.mxu0
        %2335 = vmatprep.mubr.f32.mxu0 %v232
        %2336 = vmatmul.mubr.f32.gmra.mxu0 %v231
        %v2337 = vpop.f32.mrf.mxu0
        %v2338 = vadd.f32 %v2203, %v2337
        %v2339 = vpop.f32.mrf.mxu0
        %2340 = vmatprep.mubr.f32.mxu0 %v244
        %2341 = vmatmul.mubr.f32.gmra.mxu0 %v243
        %v2342 = vpop.f32.mrf.mxu0
        %v2343 = vadd.f32 %v2208, %v2342
        %v2344 = vpop.f32.mrf.mxu0
        %2345 = vmatprep.mubr.f32.mxu0 %v256
        %2346 = vmatmul.mubr.f32.gmra.mxu0 %v255
        %v2347 = vpop.f32.mrf.mxu0
        %v2348 = vadd.f32 %v2213, %v2347
        %v2349 = vpop.f32.mrf.mxu0
        %2350 = vmatprep.mubr.f32.mxu0 %v268
        %2351 = vmatmul.mubr.f32.gmra.mxu0 %v267
        %v2352 = vpop.f32.mrf.mxu0
        %v2353 = vadd.f32 %v2218, %v2352
        %v2354 = vpop.f32.mrf.mxu0
        %2355 = vmatprep.mubr.f32.mxu0 %v280
        %2356 = vmatmul.mubr.f32.gmra.mxu0 %v279
        %v2357 = vpop.f32.mrf.mxu0
        %v2358 = vadd.f32 %v2223, %v2357
        %v2359 = vpop.f32.mrf.mxu0
        %2360 = vmatprep.mubr.f32.mxu0 %v292
        %2361 = vmatmul.mubr.f32.gmra.mxu0 %v291
        %v2362 = vpop.f32.mrf.mxu0
        %v2363 = vadd.f32 %v2228, %v2362
        %v2364 = vpop.f32.mrf.mxu0
        %2365 = vmatprep.mubr.f32.mxu0 %v304
        %2366 = vmatmul.mubr.f32.gmra.mxu0 %v303
        %v2367 = vpop.f32.mrf.mxu0
        %v2368 = vadd.f32 %v2233, %v2367
        %v2369 = vpop.f32.mrf.mxu0
        %2370 = vmatprep.mubr.f32.mxu0 %v316
        %2371 = vmatmul.mubr.f32.gmra.mxu0 %v315
        %v2372 = vpop.f32.mrf.mxu0
        %v2373 = vadd.f32 %v2238, %v2372
        %v2374 = vpop.f32.mrf.mxu0
        %2375 = vmatprep.mubr.f32.mxu0 %v328
        %2376 = vmatmul.mubr.f32.gmra.mxu0 %v327
        %v2377 = vpop.f32.mrf.mxu0
        %v2378 = vadd.f32 %v2243, %v2377
        %v2379 = vpop.f32.mrf.mxu0
        %2380 = vmatprep.mubr.f32.mxu0 %v340
        %2381 = vmatmul.mubr.f32.gmra.mxu0 %v339
        %v2382 = vpop.f32.mrf.mxu0
        %v2383 = vadd.f32 %v2248, %v2382
        %v2384 = vpop.f32.mrf.mxu0
        %2385 = vmatprep.mubr.f32.mxu0 %v352
        %2386 = vmatmul.mubr.f32.gmra.mxu0 %v351
        %v2387 = vpop.f32.mrf.mxu0
        %v2388 = vadd.f32 %v2253, %v2387
        %v2389 = vpop.f32.mrf.mxu0
        %2390 = vmatprep.mubr.f32.mxu0 %v364
        %2391 = vmatmul.mubr.f32.gmra.mxu0 %v363
        %v2392 = vpop.f32.mrf.mxu0
        %v2393 = vadd.f32 %v2258, %v2392
        %v2394 = vpop.f32.mrf.mxu0
        %2395 = vdwg.mxu0
        %2396 = vmatprep.subr.mxu0 0.0
        %2397 = vmatpush1.msra.mxu0 %v800
        %2398 = vmatprep.subr.mxu0 0.0
        %2399 = vmatpush1.msra.mxu0 %v797
        %2400 = vmatprep.subr.mxu0 0.0
        %2401 = vmatpush1.msra.mxu0 %v794
        %2402 = vmatprep.subr.mxu0 0.0
        %2403 = vmatpush1.msra.mxu0 %v791
        %2404 = vmatprep.subr.mxu0 0.0
        %2405 = vmatpush1.msra.mxu0 %v788
        %2406 = vmatprep.subr.mxu0 0.0
        %2407 = vmatpush1.msra.mxu0 %v785
        %2408 = vmatprep.subr.mxu0 0.0
        %2409 = vmatpush1.msra.mxu0 %v782
        %2410 = vmatprep.subr.mxu0 0.0
        %2411 = vmatpush1.msra.mxu0 %v779
        %2412 = vmatprep.subr.mxu0 0.0
        %2413 = vmatpush1.msra.mxu0 %v776
        %2414 = vmatprep.subr.mxu0 0.0
        %2415 = vmatpush1.msra.mxu0 %v773
        %2416 = vmatprep.subr.mxu0 0.0
        %2417 = vmatpush1.msra.mxu0 %v770
        %2418 = vmatprep.subr.mxu0 0.0
        %2419 = vmatpush1.msra.mxu0 %v767
        %2420 = vmatprep.subr.mxu0 0.0
        %2421 = vmatpush1.msra.mxu0 %v764
        %2422 = vmatprep.subr.mxu0 0.0
        %2423 = vmatpush1.msra.mxu0 %v761
        %2424 = vmatprep.subr.mxu0 0.0
        %2425 = vmatpush1.msra.mxu0 %v758
        %2426 = vmatprep.subr.mxu0 0.0
        %2427 = vmatpush1.msra.mxu0 %v755
        %2428 = vmatprep.subr.mxu0 0.0
        %2429 = vmatpush2.msra.mxu0 %v848
        %2430 = vmatprep.subr.mxu0 0.0
        %2431 = vmatpush2.msra.mxu0 %v845
        %2432 = vmatprep.subr.mxu0 0.0
        %2433 = vmatpush2.msra.mxu0 %v842
        %2434 = vmatprep.subr.mxu0 0.0
        %2435 = vmatpush2.msra.mxu0 %v839
        %2436 = vmatprep.subr.mxu0 0.0
        %2437 = vmatpush2.msra.mxu0 %v836
        %2438 = vmatprep.subr.mxu0 0.0
        %2439 = vmatpush2.msra.mxu0 %v833
        %2440 = vmatprep.subr.mxu0 0.0
        %2441 = vmatpush2.msra.mxu0 %v830
        %2442 = vmatprep.subr.mxu0 0.0
        %2443 = vmatpush2.msra.mxu0 %v827
        %2444 = vmatprep.subr.mxu0 0.0
        %2445 = vmatpush2.msra.mxu0 %v824
        %2446 = vmatprep.subr.mxu0 0.0
        %2447 = vmatpush2.msra.mxu0 %v821
        %2448 = vmatprep.subr.mxu0 0.0
        %2449 = vmatpush2.msra.mxu0 %v818
        %2450 = vmatprep.subr.mxu0 0.0
        %2451 = vmatpush2.msra.mxu0 %v815
        %2452 = vmatprep.subr.mxu0 0.0
        %2453 = vmatpush2.msra.mxu0 %v812
        %2454 = vmatprep.subr.mxu0 0.0
        %2455 = vmatpush2.msra.mxu0 %v809
        %2456 = vmatprep.subr.mxu0 0.0
        %2457 = vmatpush2.msra.mxu0 %v806
        %2458 = vmatprep.subr.mxu0 0.0
        %2459 = vmatpush2.msra.mxu0 %v803
        %2460 = vmatprep.mubr.f32.mxu0 %v210
        %2461 = vmatmul.mubr.f32.gmra.mxu0 %v209
        %v2462 = vpop.f32.mrf.mxu0
        %v2463 = vadd.f32 %v2328, %v2462
        %v2464 = vpop.f32.mrf.mxu0
        %2465 = vmatprep.mubr.f32.mxu0 %v222
        %2466 = vmatmul.mubr.f32.gmra.mxu0 %v221
        %v2467 = vpop.f32.mrf.mxu0
        %v2468 = vadd.f32 %v2333, %v2467
        %v2469 = vpop.f32.mrf.mxu0
        %2470 = vmatprep.mubr.f32.mxu0 %v234
        %2471 = vmatmul.mubr.f32.gmra.mxu0 %v233
        %v2472 = vpop.f32.mrf.mxu0
        %v2473 = vadd.f32 %v2338, %v2472
        %v2474 = vpop.f32.mrf.mxu0
        %2475 = vmatprep.mubr.f32.mxu0 %v246
        %2476 = vmatmul.mubr.f32.gmra.mxu0 %v245
        %v2477 = vpop.f32.mrf.mxu0
        %v2478 = vadd.f32 %v2343, %v2477
        %v2479 = vpop.f32.mrf.mxu0
        %2480 = vmatprep.mubr.f32.mxu0 %v258
        %2481 = vmatmul.mubr.f32.gmra.mxu0 %v257
        %v2482 = vpop.f32.mrf.mxu0
        %v2483 = vadd.f32 %v2348, %v2482
        %v2484 = vpop.f32.mrf.mxu0
        %2485 = vmatprep.mubr.f32.mxu0 %v270
        %2486 = vmatmul.mubr.f32.gmra.mxu0 %v269
        %v2487 = vpop.f32.mrf.mxu0
        %v2488 = vadd.f32 %v2353, %v2487
        %v2489 = vpop.f32.mrf.mxu0
        %2490 = vmatprep.mubr.f32.mxu0 %v282
        %2491 = vmatmul.mubr.f32.gmra.mxu0 %v281
        %v2492 = vpop.f32.mrf.mxu0
        %v2493 = vadd.f32 %v2358, %v2492
        %v2494 = vpop.f32.mrf.mxu0
        %2495 = vmatprep.mubr.f32.mxu0 %v294
        %2496 = vmatmul.mubr.f32.gmra.mxu0 %v293
        %v2497 = vpop.f32.mrf.mxu0
        %v2498 = vadd.f32 %v2363, %v2497
        %v2499 = vpop.f32.mrf.mxu0
        %2500 = vmatprep.mubr.f32.mxu0 %v306
        %2501 = vmatmul.mubr.f32.gmra.mxu0 %v305
        %v2502 = vpop.f32.mrf.mxu0
        %v2503 = vadd.f32 %v2368, %v2502
        %v2504 = vpop.f32.mrf.mxu0
        %2505 = vmatprep.mubr.f32.mxu0 %v318
        %2506 = vmatmul.mubr.f32.gmra.mxu0 %v317
        %v2507 = vpop.f32.mrf.mxu0
        %v2508 = vadd.f32 %v2373, %v2507
        %v2509 = vpop.f32.mrf.mxu0
        %2510 = vmatprep.mubr.f32.mxu0 %v330
        %2511 = vmatmul.mubr.f32.gmra.mxu0 %v329
        %v2512 = vpop.f32.mrf.mxu0
        %v2513 = vadd.f32 %v2378, %v2512
        %v2514 = vpop.f32.mrf.mxu0
        %2515 = vmatprep.mubr.f32.mxu0 %v342
        %2516 = vmatmul.mubr.f32.gmra.mxu0 %v341
        %v2517 = vpop.f32.mrf.mxu0
        %v2518 = vadd.f32 %v2383, %v2517
        %v2519 = vpop.f32.mrf.mxu0
        %2520 = vmatprep.mubr.f32.mxu0 %v354
        %2521 = vmatmul.mubr.f32.gmra.mxu0 %v353
        %v2522 = vpop.f32.mrf.mxu0
        %v2523 = vadd.f32 %v2388, %v2522
        %v2524 = vpop.f32.mrf.mxu0
        %2525 = vmatprep.mubr.f32.mxu0 %v366
        %2526 = vmatmul.mubr.f32.gmra.mxu0 %v365
        %v2527 = vpop.f32.mrf.mxu0
        %v2528 = vadd.f32 %v2393, %v2527
        %v2529 = vpop.f32.mrf.mxu0
        %2530 = vdwg.mxu0
        %2531 = vmatprep.subr.mxu0 0.0
        %2532 = vmatpush1.msra.mxu0 %v896
        %2533 = vmatprep.subr.mxu0 0.0
        %2534 = vmatpush1.msra.mxu0 %v893
        %2535 = vmatprep.subr.mxu0 0.0
        %2536 = vmatpush1.msra.mxu0 %v890
        %2537 = vmatprep.subr.mxu0 0.0
        %2538 = vmatpush1.msra.mxu0 %v887
        %2539 = vmatprep.subr.mxu0 0.0
        %2540 = vmatpush1.msra.mxu0 %v884
        %2541 = vmatprep.subr.mxu0 0.0
        %2542 = vmatpush1.msra.mxu0 %v881
        %2543 = vmatprep.subr.mxu0 0.0
        %2544 = vmatpush1.msra.mxu0 %v878
        %2545 = vmatprep.subr.mxu0 0.0
        %2546 = vmatpush1.msra.mxu0 %v875
        %2547 = vmatprep.subr.mxu0 0.0
        %2548 = vmatpush1.msra.mxu0 %v872
        %2549 = vmatprep.subr.mxu0 0.0
        %2550 = vmatpush1.msra.mxu0 %v869
        %2551 = vmatprep.subr.mxu0 0.0
        %2552 = vmatpush1.msra.mxu0 %v866
        %2553 = vmatprep.subr.mxu0 0.0
        %2554 = vmatpush1.msra.mxu0 %v863
        %2555 = vmatprep.subr.mxu0 0.0
        %2556 = vmatpush1.msra.mxu0 %v860
        %2557 = vmatprep.subr.mxu0 0.0
        %2558 = vmatpush1.msra.mxu0 %v857
        %2559 = vmatprep.subr.mxu0 0.0
        %2560 = vmatpush1.msra.mxu0 %v854
        %2561 = vmatprep.subr.mxu0 0.0
        %2562 = vmatpush1.msra.mxu0 %v851
        %2563 = vmatprep.subr.mxu0 0.0
        %2564 = vmatpush2.msra.mxu0 %v944
        %2565 = vmatprep.subr.mxu0 0.0
        %2566 = vmatpush2.msra.mxu0 %v941
        %2567 = vmatprep.subr.mxu0 0.0
        %2568 = vmatpush2.msra.mxu0 %v938
        %2569 = vmatprep.subr.mxu0 0.0
        %2570 = vmatpush2.msra.mxu0 %v935
        %2571 = vmatprep.subr.mxu0 0.0
        %2572 = vmatpush2.msra.mxu0 %v932
        %2573 = vmatprep.subr.mxu0 0.0
        %2574 = vmatpush2.msra.mxu0 %v929
        %2575 = vmatprep.subr.mxu0 0.0
        %2576 = vmatpush2.msra.mxu0 %v926
        %2577 = vmatprep.subr.mxu0 0.0
        %2578 = vmatpush2.msra.mxu0 %v923
        %2579 = vmatprep.subr.mxu0 0.0
        %2580 = vmatpush2.msra.mxu0 %v920
        %2581 = vmatprep.subr.mxu0 0.0
        %2582 = vmatpush2.msra.mxu0 %v917
        %2583 = vmatprep.subr.mxu0 0.0
        %2584 = vmatpush2.msra.mxu0 %v914
        %2585 = vmatprep.subr.mxu0 0.0
        %2586 = vmatpush2.msra.mxu0 %v911
        %2587 = vmatprep.subr.mxu0 0.0
        %2588 = vmatpush2.msra.mxu0 %v908
        %2589 = vmatprep.subr.mxu0 0.0
        %2590 = vmatpush2.msra.mxu0 %v905
        %2591 = vmatprep.subr.mxu0 0.0
        %2592 = vmatpush2.msra.mxu0 %v902
        %2593 = vmatprep.subr.mxu0 0.0
        %2594 = vmatpush2.msra.mxu0 %v899
        %2595 = vmatprep.mubr.f32.mxu0 %v212
        %2596 = vmatmul.mubr.f32.gmra.mxu0 %v211
        %v2597 = vpop.f32.mrf.mxu0
        %v2598 = vadd.f32 %v2463, %v2597
        %v2599 = vpop.f32.mrf.mxu0
        %2600 = vmatprep.mubr.f32.mxu0 %v224
        %2601 = vmatmul.mubr.f32.gmra.mxu0 %v223
        %v2602 = vpop.f32.mrf.mxu0
        %v2603 = vadd.f32 %v2468, %v2602
        %v2604 = vpop.f32.mrf.mxu0
        %2605 = vmatprep.mubr.f32.mxu0 %v236
        %2606 = vmatmul.mubr.f32.gmra.mxu0 %v235
        %v2607 = vpop.f32.mrf.mxu0
        %v2608 = vadd.f32 %v2473, %v2607
        %v2609 = vpop.f32.mrf.mxu0
        %2610 = vmatprep.mubr.f32.mxu0 %v248
        %2611 = vmatmul.mubr.f32.gmra.mxu0 %v247
        %v2612 = vpop.f32.mrf.mxu0
        %v2613 = vadd.f32 %v2478, %v2612
        %v2614 = vpop.f32.mrf.mxu0
        %2615 = vmatprep.mubr.f32.mxu0 %v260
        %2616 = vmatmul.mubr.f32.gmra.mxu0 %v259
        %v2617 = vpop.f32.mrf.mxu0
        %v2618 = vadd.f32 %v2483, %v2617
        %v2619 = vpop.f32.mrf.mxu0
        %2620 = vmatprep.mubr.f32.mxu0 %v272
        %2621 = vmatmul.mubr.f32.gmra.mxu0 %v271
        %v2622 = vpop.f32.mrf.mxu0
        %v2623 = vadd.f32 %v2488, %v2622
        %v2624 = vpop.f32.mrf.mxu0
        %2625 = vmatprep.mubr.f32.mxu0 %v284
        %2626 = vmatmul.mubr.f32.gmra.mxu0 %v283
        %v2627 = vpop.f32.mrf.mxu0
        %v2628 = vadd.f32 %v2493, %v2627
        %v2629 = vpop.f32.mrf.mxu0
        %2630 = vmatprep.mubr.f32.mxu0 %v296
        %2631 = vmatmul.mubr.f32.gmra.mxu0 %v295
        %v2632 = vpop.f32.mrf.mxu0
        %v2633 = vadd.f32 %v2498, %v2632
        %v2634 = vpop.f32.mrf.mxu0
        %2635 = vmatprep.mubr.f32.mxu0 %v308
        %2636 = vmatmul.mubr.f32.gmra.mxu0 %v307
        %v2637 = vpop.f32.mrf.mxu0
        %v2638 = vadd.f32 %v2503, %v2637
        %v2639 = vpop.f32.mrf.mxu0
        %2640 = vmatprep.mubr.f32.mxu0 %v320
        %2641 = vmatmul.mubr.f32.gmra.mxu0 %v319
        %v2642 = vpop.f32.mrf.mxu0
        %v2643 = vadd.f32 %v2508, %v2642
        %v2644 = vpop.f32.mrf.mxu0
        %2645 = vmatprep.mubr.f32.mxu0 %v332
        %2646 = vmatmul.mubr.f32.gmra.mxu0 %v331
        %v2647 = vpop.f32.mrf.mxu0
        %v2648 = vadd.f32 %v2513, %v2647
        %v2649 = vpop.f32.mrf.mxu0
        %2650 = vmatprep.mubr.f32.mxu0 %v344
        %2651 = vmatmul.mubr.f32.gmra.mxu0 %v343
        %v2652 = vpop.f32.mrf.mxu0
        %v2653 = vadd.f32 %v2518, %v2652
        %v2654 = vpop.f32.mrf.mxu0
        %2655 = vmatprep.mubr.f32.mxu0 %v356
        %2656 = vmatmul.mubr.f32.gmra.mxu0 %v355
        %v2657 = vpop.f32.mrf.mxu0
        %v2658 = vadd.f32 %v2523, %v2657
        %v2659 = vpop.f32.mrf.mxu0
        %2660 = vmatprep.mubr.f32.mxu0 %v368
        %2661 = vmatmul.mubr.f32.gmra.mxu0 %v367
        %v2662 = vpop.f32.mrf.mxu0
        %v2663 = vadd.f32 %v2528, %v2662
        %v2664 = vpop.f32.mrf.mxu0
        %2665 = vdwg.mxu0
        %2666 = vst [vmem:[%s177] sm:$0xff] %v1774
        %2667 = vst [vmem:[%s177 + $0x8] sm:$0xff] %v1776
        %2668 = vst [vmem:[%s177 + $0x10] sm:$0xff] %v2598
        %2669 = vst [vmem:[%s177 + $0x18] sm:$0xff] %v1780
        %2670 = vst [vmem:[%s177 + $0x20] sm:$0xff] %v1782
        %2671 = vst [vmem:[%s177 + $0x28] sm:$0xff] %v2603
        %2672 = vst [vmem:[%s177 + $0x30] sm:$0xff] %v1786
        %2673 = vst [vmem:[%s177 + $0x38] sm:$0xff] %v1788
        %2674 = vst [vmem:[%s177 + $0x40] sm:$0xff] %v2608
        %2675 = vst [vmem:[%s177 + $0x48] sm:$0xff] %v1792
        %2676 = vst [vmem:[%s177 + $0x50] sm:$0xff] %v1794
        %2677 = vst [vmem:[%s177 + $0x58] sm:$0xff] %v2613
        %2678 = vst [vmem:[%s177 + $0x60] sm:$0xff] %v1798
        %2679 = vst [vmem:[%s177 + $0x68] sm:$0xff] %v1800
        %2680 = vst [vmem:[%s177 + $0x70] sm:$0xff] %v2618
        %2681 = vst [vmem:[%s177 + $0x78] sm:$0xff] %v1804
        %2682 = vst [vmem:[%s177 + $0x80] sm:$0xff] %v1806
        %2683 = vst [vmem:[%s177 + $0x88] sm:$0xff] %v2623
        %2684 = vst [vmem:[%s177 + $0x90] sm:$0xff] %v1810
        %2685 = vst [vmem:[%s177 + $0x98] sm:$0xff] %v1812
        %2686 = vst [vmem:[%s177 + $0xa0] sm:$0xff] %v2628
        %2687 = vst [vmem:[%s177 + $0xa8] sm:$0xff] %v1816
        %2688 = vst [vmem:[%s177 + $0xb0] sm:$0xff] %v1818
        %2689 = vst [vmem:[%s177 + $0xb8] sm:$0xff] %v2633
        %2690 = vst [vmem:[%s177 + $0xc0] sm:$0xff] %v1822
        %2691 = vst [vmem:[%s177 + $0xc8] sm:$0xff] %v1824
        %2692 = vst [vmem:[%s177 + $0xd0] sm:$0xff] %v2638
        %2693 = vst [vmem:[%s177 + $0xd8] sm:$0xff] %v1828
        %2694 = vst [vmem:[%s177 + $0xe0] sm:$0xff] %v1830
        %2695 = vst [vmem:[%s177 + $0xe8] sm:$0xff] %v2643
        %2696 = vst [vmem:[%s177 + $0xf0] sm:$0xff] %v1834
        %2697 = vst [vmem:[%s177 + $0xf8] sm:$0xff] %v1836
        %2698 = vst [vmem:[%s177 + $0x100] sm:$0xff] %v2648
        %2699 = vst [vmem:[%s177 + $0x108] sm:$0xff] %v1840
        %2700 = vst [vmem:[%s177 + $0x110] sm:$0xff] %v1842
        %2701 = vst [vmem:[%s177 + $0x118] sm:$0xff] %v2653
        %2702 = vst [vmem:[%s177 + $0x120] sm:$0xff] %v1846
        %2703 = vst [vmem:[%s177 + $0x128] sm:$0xff] %v1848
        %2704 = vst [vmem:[%s177 + $0x130] sm:$0xff] %v2658
        %2705 = vst [vmem:[%s177 + $0x138] sm:$0xff] %v1852
        %2706 = vst [vmem:[%s177 + $0x140] sm:$0xff] %v1854
        %2707 = vst [vmem:[%s177 + $0x148] sm:$0xff] %v2663
        %s2708 = sand.u32 %s90, 1
        %s2709 = sand.u32 %s90, 1
        %s2710 = smul.addr %s2709, 336
        %s2711 = scalar_lea.vmem [#allocation2], %s2710
        // Predicated region
        $region33: #{module_forward.1} parent=31 // pred_check
          %p2712 = pneg %p100
        $region34: #{module_forward.1} parent=31 // pred_check_branch
          %2714 = sbr.rel (%p2712) target = $region36
        $region35: #{module_forward.1} parent=31 // pred_region
          %s2715 = smul.u32 14, %s14
          %s2716 = ssub.s32 25, %s2715
          %p2717 = scmp.lt.s32.totalorder %s2716, 14
          %s2718 = scalar_select %p2717, %s2716, 14
          %s2719 = smul.u32 128, %s2718
          %s2720 = smul.u32 %s2719, 3
          %p2721 = scmp.ne.s32.totalorder 0, %s2720
          %s2722 = smul.addr %s2715, 3
          %s2723 = smul.addr %s2722, 8
          %s2724 = scalar_lea.vmem %s3, %s2723
          // Predicated region
          $region37: #{module_forward.1} parent=35 // pred_check
            %p2725 = pneg %p2721
          $region38: #{module_forward.1} parent=35 // pred_check_branch
            %2727 = sbr.rel (%p2725) target = $region40
          $region39: #{module_forward.1} parent=35 // pred_region
            // Predicated region
            $region41: #{module_forward.1} parent=39 // pred_check
              _
            $region42: #{module_forward.1} parent=39 // pred_check_branch
              %2729 = sbr.rel (0) target = $region44
            $region43: #{module_forward.1} parent=39 // pred_region
              %s2730 = sdiv.u32.pop %s2718, 14
              %s2731 = srem.u32.pop %s2718, 14
              // While loop
              $region45: #{module_forward.1} parent=43 // loop_pre_header
                _
              $region46: #{module_forward.1} parent=43 // loop_header
                %s2733 = sphi 0, %s2735
                %p2734 = scmp.ge.s32.totalorder %s2733, %s2730
                %s2738 = sphi 0, %s2827
                %s2739 = sphi %s2711, %s2830
                %s2740 = sphi %s2724, %s2831
              $region47: #{module_forward.1} parent=43 // loop_header_branch
                %2737 = sbr.rel (%p2734) target = $region51
              $region48: #{module_forward.1} parent=43 // loop_body
                %v2741 = vld [vmem:[%s2739] sm:$0xff]
                %2742 = vst [vmem:[%s2740] sm:$0xff] %v2741
                %v2743 = vld [vmem:[%s2739 + $0x18] sm:$0xff]
                %2744 = vst [vmem:[%s2740 + $0x18] sm:$0xff] %v2743
                %v2745 = vld [vmem:[%s2739 + $0x30] sm:$0xff]
                %2746 = vst [vmem:[%s2740 + $0x30] sm:$0xff] %v2745
                %v2747 = vld [vmem:[%s2739 + $0x48] sm:$0xff]
                %2748 = vst [vmem:[%s2740 + $0x48] sm:$0xff] %v2747
                %v2749 = vld [vmem:[%s2739 + $0x60] sm:$0xff]
                %2750 = vst [vmem:[%s2740 + $0x60] sm:$0xff] %v2749
                %v2751 = vld [vmem:[%s2739 + $0x78] sm:$0xff]
                %2752 = vst [vmem:[%s2740 + $0x78] sm:$0xff] %v2751
                %v2753 = vld [vmem:[%s2739 + $0x90] sm:$0xff]
                %2754 = vst [vmem:[%s2740 + $0x90] sm:$0xff] %v2753
                %v2755 = vld [vmem:[%s2739 + $0xa8] sm:$0xff]
                %2756 = vst [vmem:[%s2740 + $0xa8] sm:$0xff] %v2755
                %v2757 = vld [vmem:[%s2739 + $0xc0] sm:$0xff]
                %2758 = vst [vmem:[%s2740 + $0xc0] sm:$0xff] %v2757
                %v2759 = vld [vmem:[%s2739 + $0xd8] sm:$0xff]
                %2760 = vst [vmem:[%s2740 + $0xd8] sm:$0xff] %v2759
                %v2761 = vld [vmem:[%s2739 + $0xf0] sm:$0xff]
                %2762 = vst [vmem:[%s2740 + $0xf0] sm:$0xff] %v2761
                %v2763 = vld [vmem:[%s2739 + $0x108] sm:$0xff]
                %2764 = vst [vmem:[%s2740 + $0x108] sm:$0xff] %v2763
                %v2765 = vld [vmem:[%s2739 + $0x120] sm:$0xff]
                %2766 = vst [vmem:[%s2740 + $0x120] sm:$0xff] %v2765
                %v2767 = vld [vmem:[%s2739 + $0x138] sm:$0xff]
                %2768 = vst [vmem:[%s2740 + $0x138] sm:$0xff] %v2767
                %v2769 = vld [vmem:[%s2739 + $0x8] sm:$0xff]
                %2770 = vst [vmem:[%s2740 + $0x8] sm:$0xff] %v2769
                %v2771 = vld [vmem:[%s2739 + $0x20] sm:$0xff]
                %2772 = vst [vmem:[%s2740 + $0x20] sm:$0xff] %v2771
                %v2773 = vld [vmem:[%s2739 + $0x38] sm:$0xff]
                %2774 = vst [vmem:[%s2740 + $0x38] sm:$0xff] %v2773
                %v2775 = vld [vmem:[%s2739 + $0x50] sm:$0xff]
                %2776 = vst [vmem:[%s2740 + $0x50] sm:$0xff] %v2775
                %v2777 = vld [vmem:[%s2739 + $0x68] sm:$0xff]
                %2778 = vst [vmem:[%s2740 + $0x68] sm:$0xff] %v2777
                %v2779 = vld [vmem:[%s2739 + $0x80] sm:$0xff]
                %2780 = vst [vmem:[%s2740 + $0x80] sm:$0xff] %v2779
                %v2781 = vld [vmem:[%s2739 + $0x98] sm:$0xff]
                %2782 = vst [vmem:[%s2740 + $0x98] sm:$0xff] %v2781
                %v2783 = vld [vmem:[%s2739 + $0xb0] sm:$0xff]
                %2784 = vst [vmem:[%s2740 + $0xb0] sm:$0xff] %v2783
                %v2785 = vld [vmem:[%s2739 + $0xc8] sm:$0xff]
                %2786 = vst [vmem:[%s2740 + $0xc8] sm:$0xff] %v2785
                %v2787 = vld [vmem:[%s2739 + $0xe0] sm:$0xff]
                %2788 = vst [vmem:[%s2740 + $0xe0] sm:$0xff] %v2787
                %v2789 = vld [vmem:[%s2739 + $0xf8] sm:$0xff]
                %2790 = vst [vmem:[%s2740 + $0xf8] sm:$0xff] %v2789
                %v2791 = vld [vmem:[%s2739 + $0x110] sm:$0xff]
                %2792 = vst [vmem:[%s2740 + $0x110] sm:$0xff] %v2791
                %v2793 = vld [vmem:[%s2739 + $0x128] sm:$0xff]
                %2794 = vst [vmem:[%s2740 + $0x128] sm:$0xff] %v2793
                %v2795 = vld [vmem:[%s2739 + $0x140] sm:$0xff]
                %2796 = vst [vmem:[%s2740 + $0x140] sm:$0xff] %v2795
                %v2797 = vld [vmem:[%s2739 + $0x10] sm:$0xff]
                %2798 = vst [vmem:[%s2740 + $0x10] sm:$0xff] %v2797
                %v2799 = vld [vmem:[%s2739 + $0x28] sm:$0xff]
                %2800 = vst [vmem:[%s2740 + $0x28] sm:$0xff] %v2799
                %v2801 = vld [vmem:[%s2739 + $0x40] sm:$0xff]
                %2802 = vst [vmem:[%s2740 + $0x40] sm:$0xff] %v2801
                %v2803 = vld [vmem:[%s2739 + $0x58] sm:$0xff]
                %2804 = vst [vmem:[%s2740 + $0x58] sm:$0xff] %v2803
                %v2805 = vld [vmem:[%s2739 + $0x70] sm:$0xff]
                %2806 = vst [vmem:[%s2740 + $0x70] sm:$0xff] %v2805
                %v2807 = vld [vmem:[%s2739 + $0x88] sm:$0xff]
                %2808 = vst [vmem:[%s2740 + $0x88] sm:$0xff] %v2807
                %v2809 = vld [vmem:[%s2739 + $0xa0] sm:$0xff]
                %2810 = vst [vmem:[%s2740 + $0xa0] sm:$0xff] %v2809
                %v2811 = vld [vmem:[%s2739 + $0xb8] sm:$0xff]
                %2812 = vst [vmem:[%s2740 + $0xb8] sm:$0xff] %v2811
                %v2813 = vld [vmem:[%s2739 + $0xd0] sm:$0xff]
                %2814 = vst [vmem:[%s2740 + $0xd0] sm:$0xff] %v2813
                %v2815 = vld [vmem:[%s2739 + $0xe8] sm:$0xff]
                %2816 = vst [vmem:[%s2740 + $0xe8] sm:$0xff] %v2815
                %v2817 = vld [vmem:[%s2739 + $0x100] sm:$0xff]
                %2818 = vst [vmem:[%s2740 + $0x100] sm:$0xff] %v2817
                %v2819 = vld [vmem:[%s2739 + $0x118] sm:$0xff]
                %2820 = vst [vmem:[%s2740 + $0x118] sm:$0xff] %v2819
                %v2821 = vld [vmem:[%s2739 + $0x130] sm:$0xff]
                %2822 = vst [vmem:[%s2740 + $0x130] sm:$0xff] %v2821
                %v2823 = vld [vmem:[%s2739 + $0x148] sm:$0xff]
                %2824 = vst [vmem:[%s2740 + $0x148] sm:$0xff] %v2823
                %s2825 = sadd.s32 1, %s2738
                %p2826 = scmp.ge.s32.totalorder %s2825, %s2730
                %s2827 = scalar_select %p2826, 0, %s2825
                %s2828 = smul.u32 %s2827, 336
                %s2829 = smul.u32 %s2827, 336
                %s2830 = scalar_lea.vmem %s2711, %s2828 [#allocation2]
                %s2831 = scalar_lea.vmem %s2724, %s2829
              $region49: #{module_forward.1} parent=43 // loop_footer
                %s2735 = sadd.s32 %s2733, 1
              $region50: #{module_forward.1} parent=43 // loop_footer_branch
                %2732 = sbr.rel target = $region46
              $region51: #{module_forward.1} parent=43 // loop_exit
                _
              %s2832 = sdiv.u32.pop %s2718, 14
              %s2833 = srem.u32.pop %s2718, 14
              %s2834 = smul.u32 %s2832, 14
              %s2835 = smul.u32 24, %s2834
              %s2836 = scalar_lea.vmem %s2711, %s2835 [#allocation2]
              %s2837 = smul.u32 24, %s2834
              %s2838 = scalar_lea.vmem %s2724, %s2837
              // While loop
              $region52: #{module_forward.1} parent=43 // loop_pre_header
                _
              $region53: #{module_forward.1} parent=43 // loop_header
                %s2840 = sphi 0, %s2842
                %p2841 = scmp.ge.s32.totalorder %s2840, %s2833
                %s2845 = sphi 0, %s2856
                %s2846 = sphi %s2836, %s2859
                %s2847 = sphi %s2838, %s2860
              $region54: #{module_forward.1} parent=43 // loop_header_branch
                %2844 = sbr.rel (%p2841) target = $region58
              $region55: #{module_forward.1} parent=43 // loop_body
                %v2848 = vld [vmem:[%s2846] sm:$0xff]
                %2849 = vst [vmem:[%s2847] sm:$0xff] %v2848
                %v2850 = vld [vmem:[%s2846 + $0x8] sm:$0xff]
                %2851 = vst [vmem:[%s2847 + $0x8] sm:$0xff] %v2850
                %v2852 = vld [vmem:[%s2846 + $0x10] sm:$0xff]
                %2853 = vst [vmem:[%s2847 + $0x10] sm:$0xff] %v2852
                %s2854 = sadd.s32 1, %s2845
                %p2855 = scmp.ge.s32.totalorder %s2854, %s2833
                %s2856 = scalar_select %p2855, 0, %s2854
                %s2857 = smul.u32 %s2856, 24
                %s2858 = smul.u32 %s2856, 24
                %s2859 = scalar_lea.vmem %s2836, %s2857 [#allocation2]
                %s2860 = scalar_lea.vmem %s2838, %s2858
              $region56: #{module_forward.1} parent=43 // loop_footer
                %s2842 = sadd.s32 %s2840, 1
              $region57: #{module_forward.1} parent=43 // loop_footer_branch
                %2839 = sbr.rel target = $region53
              $region58: #{module_forward.1} parent=43 // loop_exit
                _
            $region44: #{module_forward.1} parent=39 // pred_fallthru
              _
            // Predicated region
            $region59: #{module_forward.1} parent=39 // pred_check
              _
            $region60: #{module_forward.1} parent=39 // pred_check_branch
              %2862 = sbr.rel target = $region62
            $region61: #{module_forward.1} parent=39 // pred_region
              _
            $region62: #{module_forward.1} parent=39 // pred_fallthru
              _
          $region40: #{module_forward.1} parent=35 // pred_fallthru
            _
          %2863 = vnop
        $region36: #{module_forward.1} parent=31 // pred_fallthru
          _
      $region32: #{module_forward.1} parent=5 // pred_fallthru
        _
      %p2864 = scmp.le.s32.totalorder 2, %s9
      // Predicated region
      $region63: #{module_forward.1} parent=5 // pred_check
        %p2865 = pneg %p2864
      $region64: #{module_forward.1} parent=5 // pred_check_branch
        %2867 = sbr.rel (%p2865) target = $region66
      $region65: #{module_forward.1} parent=5 // pred_region
        %s2868 = ssub.s32 %s9, 2
        // Predicated region
        $region67: #{module_forward.1} parent=65 // pred_check
          %p2869 = pneg %p106
        $region68: #{module_forward.1} parent=65 // pred_check_branch
          %2871 = sbr.rel (%p2869) target = $region70
        $region69: #{module_forward.1} parent=65 // pred_region
          %s2872 = sand.u32 %s91, 1
          %s2873 = sand.u32 %s91, 1
          %s2874 = smul.addr %s2873, 336
          %s2875 = scalar_lea.vmem [#allocation2], %s2874
        $region70: #{module_forward.1} parent=65 // pred_fallthru
          _
      $region66: #{module_forward.1} parent=5 // pred_fallthru
        _
    $region6: #{module_forward.1} parent=1 // loop_footer
      %s13 = sadd.s32 1, %s9
    $region7: #{module_forward.1} parent=1 // loop_footer_branch
      %8 = sbr.rel target = $region3
    $region8: #{module_forward.1} parent=1 // loop_exit
      _

</llo_original>
